<compile_context>
chip_gen: v5e
topology: v5e:2x2
jax: 0.10.0
libtpu: 0.0.40
codegen_flags: <defaults>
</compile_context>

<pallas_src>
import numpy as np

import jax
import jax.numpy as jnp
from jax import lax
from jax.experimental import pallas as pl
from jax.experimental.pallas import tpu as pltpu


# ---------------------------------------------------------------------------
# Host-side operand builders (tiny, run once at init)
# ---------------------------------------------------------------------------

def _banded_conv_weight(k, w):
    """3x3 same-conv as 3 banded matmuls over a (w, cin)-interleaved lane dim.

    k: (3, 3, cin, cout) indexed [kh, kw, cin, cout]; returns (3, w*cin, w*cout).
    Width shift + width zero-padding are baked into the band structure.
    """
    _, _, cin, cout = k.shape
    wb = np.zeros((3, w * cin, w * cout), np.float32)
    for dy in range(3):
        for dx in range(3):
            for wo in range(w):
                wi = wo + dx - 1
                if 0 <= wi < w:
                    wb[dy, wi * cin:(wi + 1) * cin, wo * cout:(wo + 1) * cout] = k[dy, dx]
    return wb


def _pool_row_selector(n_in):
    """Even-row compaction over the whole stacked slab (rows already pair-maxed)."""
    sel = np.zeros((n_in // 2, n_in), np.float32)
    sel[np.arange(n_in // 2), 2 * np.arange(n_in // 2)] = 1.0
    return sel


def _pool2_row_selector(b_tile, h1, s_pad):
    """Pool-2 row compaction that also reorders rows to (h2-major, image-minor).

    Output row h2*s_pad + b takes input row b*h1 + 2*h2 (rows b >= b_tile stay zero),
    so the FC input can be built from 8-aligned contiguous row slices.
    """
    h2n = h1 // 2
    sel = np.zeros((h2n * s_pad, b_tile * h1), np.float32)
    for h2 in range(h2n):
        for b in range(b_tile):
            sel[h2 * s_pad + b, b * h1 + 2 * h2] = 1.0
    return sel


def _pool_lane_selector(w, c):
    """Lane compaction: keep the even width group of a (w, c)-interleaved lane dim."""
    sel = np.zeros((w * c, (w // 2) * c), np.float32)
    for q in range(w // 2):
        for ch in range(c):
            sel[2 * q * c + ch, q * c + ch] = 1.0
    return sel


# ---------------------------------------------------------------------------
# Parameters (PyTorch-equivalent layout) and packing into kernel operands
# ---------------------------------------------------------------------------

def init_params(key, input_channels, input_size, hid, out_dim):
    C0, C1, C2 = input_channels, 16, 32
    conv_out = (input_size // 4) ** 2 * C2
    ks = jax.random.split(key, 22)
    normal = lambda k, shape, fan: jax.random.normal(k, shape, jnp.float32) / np.sqrt(fan)
    return dict(
        k1=normal(ks[0], (3, 3, C0, C1), 9 * C0),
        b1=normal(ks[1], (C1,), 9 * C0),
        g1=1.0 + 0.1 * jax.random.normal(ks[2], (C1,), jnp.float32),
        beta1=0.1 * jax.random.normal(ks[3], (C1,), jnp.float32),
        mu1=0.1 * jax.random.normal(ks[4], (C1,), jnp.float32),
        var1=jnp.abs(jax.random.normal(ks[5], (C1,), jnp.float32)) + 0.5,
        k2=normal(ks[6], (3, 3, C1, C2), 9 * C1),
        b2=normal(ks[7], (C2,), 9 * C1),
        g2=1.0 + 0.1 * jax.random.normal(ks[8], (C2,), jnp.float32),
        beta2=0.1 * jax.random.normal(ks[9], (C2,), jnp.float32),
        mu2=0.1 * jax.random.normal(ks[10], (C2,), jnp.float32),
        var2=jnp.abs(jax.random.normal(ks[11], (C2,), jnp.float32)) + 0.5,
        wfc=normal(ks[12], (conv_out, hid), conv_out),
        bfc=normal(ks[13], (hid,), conv_out),
        wv1=normal(ks[14], (hid, hid), hid),
        bv1=normal(ks[15], (hid,), hid),
        wv2=normal(ks[16], (hid, 1), hid),
        bv2=normal(ks[17], (1,), hid),
        wa1=normal(ks[18], (hid, hid), hid),
        ba1=normal(ks[19], (hid,), hid),
        wa2=normal(ks[20], (hid, out_dim), hid),
        ba2=normal(ks[21], (out_dim,), hid),
    )


def pack_operands(params, input_channels, input_size, hid, out_dim, batch_tile, eps=1e-5):
    C0, C1, C2 = input_channels, 16, 32
    H = W = input_size
    assert H % 8 == 0, "input_size must be a multiple of 8 for this kernel layout"
    H1, W1, H2, W2 = H // 2, W // 2, H // 4, W // 4
    B = batch_tile
    S = ((max(B, 1) + 7) // 8) * 8                    # padded per-h2 row stride (8-aligned)
    OP = max(128, ((out_dim + 127) // 128) * 128)     # lane-dense (padded) output width
    bf16, f32 = jnp.bfloat16, jnp.float32

    # Eval-mode BatchNorm folded into per-channel scale/bias (conv bias folded in too).
    s1 = params["g1"] / jnp.sqrt(params["var1"] + eps)
    t1 = (params["b1"] - params["mu1"]) * s1 + params["beta1"]
    s2 = params["g2"] / jnp.sqrt(params["var2"] + eps)
    t2 = (params["b2"] - params["mu2"]) * s2 + params["beta2"]

    # FC weight rows permuted: PyTorch NCHW flatten (c,h2,w2) -> kernel order (h2,w2,c).
    wfc_perm = (params["wfc"].reshape(C2, H2, W2, hid)
                .transpose(1, 2, 0, 3).reshape(H2 * W2 * C2, hid))

    # Advantage output weights padded to a lane-dense width (extra columns are zero,
    # so summing over all OP lanes / out_dim still gives the true mean of A).
    wa2p = jnp.zeros((hid, OP), f32).at[:, :out_dim].set(params["wa2"])
    ba2p = jnp.zeros((1, OP), f32).at[:, :out_dim].set(params["ba2"][None, :])

    ops = (
        jnp.asarray(_banded_conv_weight(np.asarray(params["k1"]), W), bf16),   # wconv1
        jnp.stack([jnp.tile(s1, W), jnp.tile(t1, W)]).astype(f32),             # sb1
        jnp.asarray(_pool_row_selector(B * H), bf16),                          # p1row
        jnp.asarray(_pool_lane_selector(W, C1), bf16),                         # s1lane
        jnp.asarray(_banded_conv_weight(np.asarray(params["k2"]), W1), bf16),  # wconv2
        jnp.stack([jnp.tile(s2, W1), jnp.tile(t2, W1)]).astype(f32),           # sb2
        jnp.asarray(_pool2_row_selector(B, H1, S), bf16),                      # p2row
        jnp.asarray(_pool_lane_selector(W1, C2), bf16),                        # s2lane
        wfc_perm.astype(bf16),                                                 # wfc
        params["bfc"].reshape(1, hid).astype(f32),                             # bfc
        jnp.concatenate([params["wv1"], params["wa1"]], axis=1).astype(bf16),  # wh1
        jnp.concatenate([params["bv1"], params["ba1"]]).reshape(1, 2 * hid).astype(f32),  # bh1
        params["wv2"].reshape(1, hid).astype(f32),                             # wv2 (VPU reduce)
        params["bv2"].reshape(1, 1).astype(f32),                               # bv2
        wa2p.astype(bf16),                                                     # wa2 (padded)
        ba2p,                                                                  # ba2 (padded)
    )
    cfg = dict(C0=C0, C1=C1, C2=C2, H=H, W=W, H1=H1, W1=W1, H2=H2, W2=W2,
               B=B, S=S, OP=OP, hid=hid, out_dim=out_dim)
    return ops, cfg


# ---------------------------------------------------------------------------
# Fused kernel (one grid step = B_tile images stacked along sublanes)
# ---------------------------------------------------------------------------

def _make_kernel(cfg):
    H, H1, H2 = cfg["H"], cfg["H1"], cfg["H2"]
    C1, C2 = cfg["C1"], cfg["C2"]
    B, S = cfg["B"], cfg["S"]
    hid, out_dim = cfg["hid"], cfg["out_dim"]
    f32, bf16 = jnp.float32, jnp.bfloat16

    def row_in_image(n_rows, h_img):
        # Row index within its image, for the per-image zero-padding masks.
        i = lax.broadcasted_iota(jnp.int32, (n_rows, 1), 0)
        if h_img & (h_img - 1) == 0:
            return jnp.bitwise_and(i, h_img - 1)
        f = i.astype(f32)
        return (f - h_img * jnp.floor(f * (1.0 / h_img))).astype(jnp.int32)

    def conv3x3_bn_relu(z, h_img, w_ref, sb_ref):
        # z: (n, W*Cin) f32; rows stacked image-major, height-minor.
        n = z.shape[0]
        r = row_in_image(n, h_img)
        # Height taps via XLU rolls + per-image boundary masks (no MXU shift matmuls).
        up = jnp.where(r > 0, pltpu.roll(z, 1, axis=0), 0.0)              # row i-1
        dn = jnp.where(r < h_img - 1, pltpu.roll(z, n - 1, axis=0), 0.0)  # row i+1
        acc = jnp.dot(up.astype(bf16), w_ref[0], preferred_element_type=f32)
        acc = acc + jnp.dot(z.astype(bf16), w_ref[1], preferred_element_type=f32)
        acc = acc + jnp.dot(dn.astype(bf16), w_ref[2], preferred_element_type=f32)
        sb = sb_ref[...]                                                   # (2, lanes) f32
        return jnp.maximum(acc * sb[0:1, :] + sb[1:2, :], 0.0)            # folded BN + ReLU

    def maxpool2x2(z, c, prow_ref, slane_ref):
        # Pairwise maxes on the free VPU/XLU slots, then one row- and one lane-
        # compaction 0/1 matmul.  Roll wrap-around only touches odd rows / the last
        # width group, which the selectors never pick.
        n, l = z.shape
        m = jnp.maximum(z, pltpu.roll(z, n - 1, axis=0))   # max(row i, row i+1)
        m = jnp.maximum(m, pltpu.roll(m, l - c, axis=1))   # max(width 2q, 2q+1), per channel
        rows = jnp.dot(prow_ref[...], m.astype(bf16), preferred_element_type=f32)
        return jnp.dot(rows.astype(bf16), slane_ref[...], preferred_element_type=f32)

    def kernel(x_ref, w1_ref, sb1_ref, p1_ref, s1_ref, w2_ref, sb2_ref, p2_ref,
               s2_ref, wfc_ref, bfc_ref, wh1_ref, bh1_ref, wv2_ref, bv2_ref,
               wa2_ref, ba2_ref, q_ref):
        x = x_ref[...]                                         # (B*H, W*C0) f32
        z = conv3x3_bn_relu(x, H, w1_ref, sb1_ref)             # (B*H,  W*C1)
        z = maxpool2x2(z, C1, p1_ref, s1_ref)                  # (B*H1, W1*C1)
        z = conv3x3_bn_relu(z, H1, w2_ref, sb2_ref)            # (B*H1, W1*C2)
        z = maxpool2x2(z, C2, p2_ref, s2_ref)                  # (H2*S, W2*C2), h2-major rows

        # Assemble each image's H2 row-blocks into lanes -> (S, H2*W2*C2); NCHW
        # flatten order is folded into wfc's row permutation, so one FC matmul.
        ywide = jnp.concatenate([z[h2 * S:(h2 + 1) * S, :] for h2 in range(H2)], axis=1)
        h = jnp.dot(ywide.astype(bf16), wfc_ref[...], preferred_element_type=f32)
        h = jnp.maximum(h + bfc_ref[...], 0.0)                 # (S, hid)
        # TODO(synk): Dropout(0.1) is the eval-mode identity (no RNG masking at inference).

        # Dueling head: value/advantage first layers fused into one matmul,
        # V via f32 VPU/XLU row-reduce, A via a lane-dense (padded) matmul.
        t = jnp.dot(h.astype(bf16), wh1_ref[...], preferred_element_type=f32)
        t = jnp.maximum(t + bh1_ref[...], 0.0)                 # (S, 2*hid)
        vh = t[:, :hid]
        ah = t[:, hid:]
        V = jnp.sum(vh * wv2_ref[...], axis=1, keepdims=True) + bv2_ref[...]        # (S, 1)
        A = jnp.dot(ah.astype(bf16), wa2_ref[...], preferred_element_type=f32) + ba2_ref[...]
        Q = V + A - jnp.sum(A, axis=1, keepdims=True) * (1.0 / out_dim)
        q_ref[0] = Q[:B].astype(q_ref.dtype)                   # lane-dense batched store

    return kernel


# ---------------------------------------------------------------------------
# Forward builder (single pallas_call, batch-tiled "parallel" grid)
# ---------------------------------------------------------------------------

def build_dueling_cnn_forward(params, input_channels, input_size, hid, out_dim,
                              batch_tile):
    ops, cfg = pack_operands(params, input_channels, input_size, hid, out_dim, batch_tile)
    kernel = _make_kernel(cfg)
    H, W, C0 = cfg["H"], cfg["W"], cfg["C0"]
    B, OP = cfg["B"], cfg["OP"]

    def const_spec(a):
        # Constant-index block: whole array VMEM-resident, DMA'd once for the kernel.
        nd = a.ndim
        return pl.BlockSpec(a.shape, lambda g, _nd=nd: (0,) * _nd)

    in_specs = [pl.BlockSpec((B * H, W * C0), lambda g: (g, 0))]
    in_specs += [const_spec(a) for a in ops]

    def forward(x, channels_last=False):
        x = x.astype(jnp.float32)
        if not channels_last:
            # PyTorch NCHW input; an NHWC producer can pass channels_last=True and
            # skip this extra HBM transpose pass.
            x = jnp.transpose(x, (0, 2, 3, 1))
        N = x.shape[0]
        assert x.shape[1:] == (H, W, C0)
        G = -(-N // B)
        n_pad = G * B
        if n_pad != N:
            x = jnp.pad(x, ((0, n_pad - N), (0, 0), (0, 0), (0, 0)))
        # rows = (image, height), lanes = (width, channel): free row-major reshape.
        x2d = x.reshape(n_pad * H, W * C0)

        q = pl.pallas_call(
            kernel,
            out_shape=jax.ShapeDtypeStruct((G, B, OP), jnp.float32),
            grid=(G,),
            in_specs=in_specs,
            out_specs=pl.BlockSpec((1, B, OP), lambda g: (g, 0, 0)),
            compiler_params=pltpu.CompilerParams(
                dimension_semantics=("parallel",)),   # batch-tile axis feeds both v7x cores
        )(x2d, *ops)
        return q.reshape(n_pad, OP)[:N, :out_dim]

    return forward


# ---------------------------------------------------------------------------
# Pure-JAX reference (matches the PyTorch module in eval mode)
# ---------------------------------------------------------------------------

def reference_forward(params, x_nchw, eps=1e-5):
    x = x_nchw.astype(jnp.float32)

    def block(x, k, b, g, beta, mu, var):
        y = lax.conv_general_dilated(x, k, window_strides=(1, 1), padding="SAME",
                                     dimension_numbers=("NCHW", "HWIO", "NCHW"))
        y = y + b[None, :, None, None]
        y = (y - mu[None, :, None, None]) * (g / jnp.sqrt(var + eps))[None, :, None, None] \
            + beta[None, :, None, None]
        y = jnp.maximum(y, 0.0)
        return lax.reduce_window(y, -jnp.inf, lax.max, (1, 1, 2, 2), (1, 1, 2, 2), "VALID")

    y = block(x, params["k1"], params["b1"], params["g1"], params["beta1"],
              params["mu1"], params["var1"])
    y = block(y, params["k2"], params["b2"], params["g2"], params["beta2"],
              params["mu2"], params["var2"])
    h = jnp.maximum(y.reshape(y.shape[0], -1) @ params["wfc"] + params["bfc"], 0.0)
    v = jnp.maximum(h @ params["wv1"] + params["bv1"], 0.0) @ params["wv2"] + params["bv2"]
    a = jnp.maximum(h @ params["wa1"] + params["ba1"], 0.0) @ params["wa2"] + params["ba2"]
    return v + a - jnp.mean(a, axis=1, keepdims=True)


# ---------------------------------------------------------------------------
# Demo / self-check
# ---------------------------------------------------------------------------

if __name__ == "__main__":
    key = jax.random.PRNGKey(0)
    kx, kp, kx2 = jax.random.split(key, 3)

    batch, input_channels, input_size = 2, 4, 16
    hid_layer_dim, out_layer_dim = 128, 2

    params = init_params(kp, input_channels, input_size, hid_layer_dim, out_layer_dim)

    # Batch tile: aim for ~256 stacked conv rows (fills the v6e/v7x MXU), capped by
    # the batch; at realistic batch sizes this gives M=256 conv matmuls and >=2
    # grid steps so both v7x TensorCores stay busy.
    batch_tile = max(1, min(batch, 256 // input_size))
    forward = jax.jit(build_dueling_cnn_forward(
        params, input_channels, input_size, hid_layer_dim, out_layer_dim, batch_tile))

    x = jax.random.normal(kx, (batch, input_channels, input_size, input_size), jnp.float32)
    q = jax.block_until_ready(forward(x))
    q_ref = reference_forward(params, x)
    err = float(jnp.max(jnp.abs(q - q_ref)))
    assert q.shape == (batch, out_layer_dim)
    assert bool(jnp.all(jnp.isfinite(q)))
    assert err < 0.15, f"kernel/reference mismatch: max abs err {err:.4f}"

    # A batch that is not a multiple of the tile: exercises the padding path and a
    # multi-step grid.
    x2 = jax.random.normal(kx2, (5, input_channels, input_size, input_size), jnp.float32)
    q2 = jax.block_until_ready(forward(x2))
    q2_ref = reference_forward(params, x2)
    err2 = float(jnp.max(jnp.abs(q2 - q2_ref)))
    assert q2.shape == (5, out_layer_dim)
    assert bool(jnp.all(jnp.isfinite(q2)))
    assert err2 < 0.15, f"kernel/reference mismatch (padded batch): max abs err {err2:.4f}"

    print("KERNEL_OK")
</pallas_src>

<mosaic_0001>
module attributes {stable_mosaic.version = 11 : i64} {
  func.func @kernel(%arg0: i32, %arg1: memref<32x64xf32, #tpu.memory_space<vmem>>, %arg2: memref<3x64x256xbf16, #tpu.memory_space<vmem>>, %arg3: memref<2x256xf32, #tpu.memory_space<vmem>>, %arg4: memref<16x32xbf16, #tpu.memory_space<vmem>>, %arg5: memref<256x128xbf16, #tpu.memory_space<vmem>>, %arg6: memref<3x128x256xbf16, #tpu.memory_space<vmem>>, %arg7: memref<2x256xf32, #tpu.memory_space<vmem>>, %arg8: memref<32x16xbf16, #tpu.memory_space<vmem>>, %arg9: memref<256x128xbf16, #tpu.memory_space<vmem>>, %arg10: memref<512x128xbf16, #tpu.memory_space<vmem>>, %arg11: memref<1x128xf32, #tpu.memory_space<vmem>>, %arg12: memref<128x256xbf16, #tpu.memory_space<vmem>>, %arg13: memref<1x256xf32, #tpu.memory_space<vmem>>, %arg14: memref<1x128xf32, #tpu.memory_space<vmem>>, %arg15: memref<1x1xf32, #tpu.memory_space<vmem>>, %arg16: memref<128x128xbf16, #tpu.memory_space<vmem>>, %arg17: memref<1x128xf32, #tpu.memory_space<vmem>>, %arg18: memref<1x2x128xf32, #tpu.memory_space<vmem>>) attributes {dimension_semantics = [#tpu.dimension_semantics<parallel>], iteration_bounds = array<i64: 1>, scalar_prefetch = 0 : i64, scratch_operands = 0 : i64, tpu.core_type = #tpu.core_type<tc>, window_params = [{transform_indices = @transform_0, window_bounds = array<i64: 32, 64>}, {pipeline_mode = #tpu.pipeline_mode<synchronous>, transform_indices = @transform_1, window_bounds = array<i64: 3, 64, 256>}, {pipeline_mode = #tpu.pipeline_mode<synchronous>, transform_indices = @transform_2, window_bounds = array<i64: 2, 256>}, {pipeline_mode = #tpu.pipeline_mode<synchronous>, transform_indices = @transform_3, window_bounds = array<i64: 16, 32>}, {pipeline_mode = #tpu.pipeline_mode<synchronous>, transform_indices = @transform_4, window_bounds = array<i64: 256, 128>}, {pipeline_mode = #tpu.pipeline_mode<synchronous>, transform_indices = @transform_5, window_bounds = array<i64: 3, 128, 256>}, {pipeline_mode = #tpu.pipeline_mode<synchronous>, transform_indices = @transform_6, window_bounds = array<i64: 2, 256>}, {pipeline_mode = #tpu.pipeline_mode<synchronous>, transform_indices = @transform_7, window_bounds = array<i64: 32, 16>}, {pipeline_mode = #tpu.pipeline_mode<synchronous>, transform_indices = @transform_8, window_bounds = array<i64: 256, 128>}, {pipeline_mode = #tpu.pipeline_mode<synchronous>, transform_indices = @transform_9, window_bounds = array<i64: 512, 128>}, {pipeline_mode = #tpu.pipeline_mode<synchronous>, transform_indices = @transform_10, window_bounds = array<i64: 1, 128>}, {pipeline_mode = #tpu.pipeline_mode<synchronous>, transform_indices = @transform_11, window_bounds = array<i64: 128, 256>}, {pipeline_mode = #tpu.pipeline_mode<synchronous>, transform_indices = @transform_12, window_bounds = array<i64: 1, 256>}, {pipeline_mode = #tpu.pipeline_mode<synchronous>, transform_indices = @transform_13, window_bounds = array<i64: 1, 128>}, {pipeline_mode = #tpu.pipeline_mode<synchronous>, transform_indices = @transform_14, window_bounds = array<i64: 1, 1>}, {pipeline_mode = #tpu.pipeline_mode<synchronous>, transform_indices = @transform_15, window_bounds = array<i64: 128, 128>}, {pipeline_mode = #tpu.pipeline_mode<synchronous>, transform_indices = @transform_16, window_bounds = array<i64: 1, 128>}, {transform_indices = @transform_17, window_bounds = array<i64: 1, 2, 128>}]} {
    %c0 = arith.constant 0 : index
    %c0_0 = arith.constant 0 : index
    %0 = vector.load %arg1[%c0, %c0_0] : memref<32x64xf32, #tpu.memory_space<vmem>>, vector<32x64xf32>
    %1 = tpu.iota {dimensions = array<i32: 0>} : vector<32x1xi32>
    %c15_i32 = arith.constant 15 : i32
    %2 = vector.broadcast %c15_i32 : i32 to vector<32x1xi32>
    %3 = arith.andi %1, %2 : vector<32x1xi32>
    %c0_i32 = arith.constant 0 : i32
    %4 = vector.broadcast %c0_i32 : i32 to vector<32x1xi32>
    %5 = arith.cmpi sgt, %3, %4 : vector<32x1xi32>
    %c1_i32 = arith.constant 1 : i32
    %6 = tpu.dynamic_rotate %0 by %c1_i32 dim 0 : vector<32x64xf32>, i32 -> vector<32x64xf32>
    %cst = arith.constant 0.000000e+00 : f32
    %7 = vector.shape_cast %5 : vector<32x1xi1> to vector<32x1xi1>
    %8 = vector.broadcast %7 : vector<32x1xi1> to vector<32x64xi1>
    %9 = vector.broadcast %cst : f32 to vector<32x64xf32>
    %10 = arith.select %8, %6, %9 : vector<32x64xi1>, vector<32x64xf32>
    %c15_i32_1 = arith.constant 15 : i32
    %11 = vector.broadcast %c15_i32_1 : i32 to vector<32x1xi32>
    %12 = arith.cmpi slt, %3, %11 : vector<32x1xi32>
    %c31_i32 = arith.constant 31 : i32
    %13 = tpu.dynamic_rotate %0 by %c31_i32 dim 0 : vector<32x64xf32>, i32 -> vector<32x64xf32>
    %cst_2 = arith.constant 0.000000e+00 : f32
    %14 = vector.shape_cast %12 : vector<32x1xi1> to vector<32x1xi1>
    %15 = vector.broadcast %14 : vector<32x1xi1> to vector<32x64xi1>
    %16 = vector.broadcast %cst_2 : f32 to vector<32x64xf32>
    %17 = arith.select %15, %13, %16 : vector<32x64xi1>, vector<32x64xf32>
    %18 = arith.truncf %10 : vector<32x64xf32> to vector<32x64xbf16>
    %c0_3 = arith.constant 0 : index
    %c0_4 = arith.constant 0 : index
    %c0_5 = arith.constant 0 : index
    %19 = vector.load %arg2[%c0_3, %c0_4, %c0_5] : memref<3x64x256xbf16, #tpu.memory_space<vmem>>, vector<1x64x256xbf16>
    %20 = vector.shape_cast %19 : vector<1x64x256xbf16> to vector<64x256xbf16>
    %cst_6 = arith.constant dense<0.000000e+00> : vector<32x256xf32>
    %21 = tpu.matmul %18, %20, %cst_6 {dimension_numbers = #tpu.dot_dimension_numbers<[1], [0], [0], [1], [0, 0, 1, 1], [], []>} : vector<32x64xbf16>, vector<64x256xbf16>, vector<32x256xf32> -> vector<32x256xf32>
    %22 = arith.truncf %0 : vector<32x64xf32> to vector<32x64xbf16>
    %c1 = arith.constant 1 : index
    %c0_7 = arith.constant 0 : index
    %c0_8 = arith.constant 0 : index
    %23 = vector.load %arg2[%c1, %c0_7, %c0_8] : memref<3x64x256xbf16, #tpu.memory_space<vmem>>, vector<1x64x256xbf16>
    %24 = vector.shape_cast %23 : vector<1x64x256xbf16> to vector<64x256xbf16>
    %cst_9 = arith.constant dense<0.000000e+00> : vector<32x256xf32>
    %25 = tpu.matmul %22, %24, %cst_9 {dimension_numbers = #tpu.dot_dimension_numbers<[1], [0], [0], [1], [0, 0, 1, 1], [], []>} : vector<32x64xbf16>, vector<64x256xbf16>, vector<32x256xf32> -> vector<32x256xf32>
    %26 = arith.addf %21, %25 : vector<32x256xf32>
    %27 = arith.truncf %17 : vector<32x64xf32> to vector<32x64xbf16>
    %c2 = arith.constant 2 : index
    %c0_10 = arith.constant 0 : index
    %c0_11 = arith.constant 0 : index
    %28 = vector.load %arg2[%c2, %c0_10, %c0_11] : memref<3x64x256xbf16, #tpu.memory_space<vmem>>, vector<1x64x256xbf16>
    %29 = vector.shape_cast %28 : vector<1x64x256xbf16> to vector<64x256xbf16>
    %cst_12 = arith.constant dense<0.000000e+00> : vector<32x256xf32>
    %30 = tpu.matmul %27, %29, %cst_12 {dimension_numbers = #tpu.dot_dimension_numbers<[1], [0], [0], [1], [0, 0, 1, 1], [], []>} : vector<32x64xbf16>, vector<64x256xbf16>, vector<32x256xf32> -> vector<32x256xf32>
    %31 = arith.addf %26, %30 : vector<32x256xf32>
    %c0_13 = arith.constant 0 : index
    %c0_14 = arith.constant 0 : index
    %32 = vector.load %arg3[%c0_13, %c0_14] : memref<2x256xf32, #tpu.memory_space<vmem>>, vector<2x256xf32>
    %33 = vector.extract_strided_slice %32 {offsets = [0, 0], sizes = [1, 256], strides = [1, 1]} : vector<2x256xf32> to vector<1x256xf32>
    %34 = vector.broadcast %33 : vector<1x256xf32> to vector<32x256xf32>
    %35 = arith.mulf %31, %34 : vector<32x256xf32>
    %36 = vector.extract_strided_slice %32 {offsets = [1, 0], sizes = [1, 256], strides = [1, 1]} : vector<2x256xf32> to vector<1x256xf32>
    %37 = vector.broadcast %36 : vector<1x256xf32> to vector<32x256xf32>
    %38 = arith.addf %35, %37 : vector<32x256xf32>
    %cst_15 = arith.constant 0.000000e+00 : f32
    %39 = vector.broadcast %cst_15 : f32 to vector<32x256xf32>
    %40 = arith.maximumf %38, %39 : vector<32x256xf32>
    %c31_i32_16 = arith.constant 31 : i32
    %41 = tpu.dynamic_rotate %40 by %c31_i32_16 dim 0 : vector<32x256xf32>, i32 -> vector<32x256xf32>
    %42 = arith.maximumf %40, %41 : vector<32x256xf32>
    %c240_i32 = arith.constant 240 : i32
    %43 = tpu.dynamic_rotate %42 by %c240_i32 dim 1 : vector<32x256xf32>, i32 -> vector<32x256xf32>
    %44 = arith.maximumf %42, %43 : vector<32x256xf32>
    %c0_17 = arith.constant 0 : index
    %c0_18 = arith.constant 0 : index
    %45 = vector.load %arg4[%c0_17, %c0_18] : memref<16x32xbf16, #tpu.memory_space<vmem>>, vector<16x32xbf16>
    %46 = arith.truncf %44 : vector<32x256xf32> to vector<32x256xbf16>
    %cst_19 = arith.constant dense<0.000000e+00> : vector<16x256xf32>
    %47 = tpu.matmul %45, %46, %cst_19 {dimension_numbers = #tpu.dot_dimension_numbers<[1], [0], [0], [1], [0, 0, 1, 1], [], []>} : vector<16x32xbf16>, vector<32x256xbf16>, vector<16x256xf32> -> vector<16x256xf32>
    %48 = arith.truncf %47 : vector<16x256xf32> to vector<16x256xbf16>
    %c0_20 = arith.constant 0 : index
    %c0_21 = arith.constant 0 : index
    %49 = vector.load %arg5[%c0_20, %c0_21] : memref<256x128xbf16, #tpu.memory_space<vmem>>, vector<256x128xbf16>
    %cst_22 = arith.constant dense<0.000000e+00> : vector<16x128xf32>
    %50 = tpu.matmul %48, %49, %cst_22 {dimension_numbers = #tpu.dot_dimension_numbers<[1], [0], [0], [1], [0, 0, 1, 1], [], []>} : vector<16x256xbf16>, vector<256x128xbf16>, vector<16x128xf32> -> vector<16x128xf32>
    %51 = tpu.iota {dimensions = array<i32: 0>} : vector<16x1xi32>
    %c7_i32 = arith.constant 7 : i32
    %52 = vector.broadcast %c7_i32 : i32 to vector<16x1xi32>
    %53 = arith.andi %51, %52 : vector<16x1xi32>
    %c0_i32_23 = arith.constant 0 : i32
    %54 = vector.broadcast %c0_i32_23 : i32 to vector<16x1xi32>
    %55 = arith.cmpi sgt, %53, %54 : vector<16x1xi32>
    %c1_i32_24 = arith.constant 1 : i32
    %56 = tpu.dynamic_rotate %50 by %c1_i32_24 dim 0 : vector<16x128xf32>, i32 -> vector<16x128xf32>
    %cst_25 = arith.constant 0.000000e+00 : f32
    %57 = vector.shape_cast %55 : vector<16x1xi1> to vector<16x1xi1>
    %58 = vector.broadcast %57 : vector<16x1xi1> to vector<16x128xi1>
    %59 = vector.broadcast %cst_25 : f32 to vector<16x128xf32>
    %60 = arith.select %58, %56, %59 : vector<16x128xi1>, vector<16x128xf32>
    %c7_i32_26 = arith.constant 7 : i32
    %61 = vector.broadcast %c7_i32_26 : i32 to vector<16x1xi32>
    %62 = arith.cmpi slt, %53, %61 : vector<16x1xi32>
    %c15_i32_27 = arith.constant 15 : i32
    %63 = tpu.dynamic_rotate %50 by %c15_i32_27 dim 0 : vector<16x128xf32>, i32 -> vector<16x128xf32>
    %cst_28 = arith.constant 0.000000e+00 : f32
    %64 = vector.shape_cast %62 : vector<16x1xi1> to vector<16x1xi1>
    %65 = vector.broadcast %64 : vector<16x1xi1> to vector<16x128xi1>
    %66 = vector.broadcast %cst_28 : f32 to vector<16x128xf32>
    %67 = arith.select %65, %63, %66 : vector<16x128xi1>, vector<16x128xf32>
    %68 = arith.truncf %60 : vector<16x128xf32> to vector<16x128xbf16>
    %c0_29 = arith.constant 0 : index
    %c0_30 = arith.constant 0 : index
    %c0_31 = arith.constant 0 : index
    %69 = vector.load %arg6[%c0_29, %c0_30, %c0_31] : memref<3x128x256xbf16, #tpu.memory_space<vmem>>, vector<1x128x256xbf16>
    %70 = vector.shape_cast %69 : vector<1x128x256xbf16> to vector<128x256xbf16>
    %cst_32 = arith.constant dense<0.000000e+00> : vector<16x256xf32>
    %71 = tpu.matmul %68, %70, %cst_32 {dimension_numbers = #tpu.dot_dimension_numbers<[1], [0], [0], [1], [0, 0, 1, 1], [], []>} : vector<16x128xbf16>, vector<128x256xbf16>, vector<16x256xf32> -> vector<16x256xf32>
    %72 = arith.truncf %50 : vector<16x128xf32> to vector<16x128xbf16>
    %c1_33 = arith.constant 1 : index
    %c0_34 = arith.constant 0 : index
    %c0_35 = arith.constant 0 : index
    %73 = vector.load %arg6[%c1_33, %c0_34, %c0_35] : memref<3x128x256xbf16, #tpu.memory_space<vmem>>, vector<1x128x256xbf16>
    %74 = vector.shape_cast %73 : vector<1x128x256xbf16> to vector<128x256xbf16>
    %cst_36 = arith.constant dense<0.000000e+00> : vector<16x256xf32>
    %75 = tpu.matmul %72, %74, %cst_36 {dimension_numbers = #tpu.dot_dimension_numbers<[1], [0], [0], [1], [0, 0, 1, 1], [], []>} : vector<16x128xbf16>, vector<128x256xbf16>, vector<16x256xf32> -> vector<16x256xf32>
    %76 = arith.addf %71, %75 : vector<16x256xf32>
    %77 = arith.truncf %67 : vector<16x128xf32> to vector<16x128xbf16>
    %c2_37 = arith.constant 2 : index
    %c0_38 = arith.constant 0 : index
    %c0_39 = arith.constant 0 : index
    %78 = vector.load %arg6[%c2_37, %c0_38, %c0_39] : memref<3x128x256xbf16, #tpu.memory_space<vmem>>, vector<1x128x256xbf16>
    %79 = vector.shape_cast %78 : vector<1x128x256xbf16> to vector<128x256xbf16>
    %cst_40 = arith.constant dense<0.000000e+00> : vector<16x256xf32>
    %80 = tpu.matmul %77, %79, %cst_40 {dimension_numbers = #tpu.dot_dimension_numbers<[1], [0], [0], [1], [0, 0, 1, 1], [], []>} : vector<16x128xbf16>, vector<128x256xbf16>, vector<16x256xf32> -> vector<16x256xf32>
    %81 = arith.addf %76, %80 : vector<16x256xf32>
    %c0_41 = arith.constant 0 : index
    %c0_42 = arith.constant 0 : index
    %82 = vector.load %arg7[%c0_41, %c0_42] : memref<2x256xf32, #tpu.memory_space<vmem>>, vector<2x256xf32>
    %83 = vector.extract_strided_slice %82 {offsets = [0, 0], sizes = [1, 256], strides = [1, 1]} : vector<2x256xf32> to vector<1x256xf32>
    %84 = vector.broadcast %83 : vector<1x256xf32> to vector<16x256xf32>
    %85 = arith.mulf %81, %84 : vector<16x256xf32>
    %86 = vector.extract_strided_slice %82 {offsets = [1, 0], sizes = [1, 256], strides = [1, 1]} : vector<2x256xf32> to vector<1x256xf32>
    %87 = vector.broadcast %86 : vector<1x256xf32> to vector<16x256xf32>
    %88 = arith.addf %85, %87 : vector<16x256xf32>
    %cst_43 = arith.constant 0.000000e+00 : f32
    %89 = vector.broadcast %cst_43 : f32 to vector<16x256xf32>
    %90 = arith.maximumf %88, %89 : vector<16x256xf32>
    %c15_i32_44 = arith.constant 15 : i32
    %91 = tpu.dynamic_rotate %90 by %c15_i32_44 dim 0 : vector<16x256xf32>, i32 -> vector<16x256xf32>
    %92 = arith.maximumf %90, %91 : vector<16x256xf32>
    %c224_i32 = arith.constant 224 : i32
    %93 = tpu.dynamic_rotate %92 by %c224_i32 dim 1 : vector<16x256xf32>, i32 -> vector<16x256xf32>
    %94 = arith.maximumf %92, %93 : vector<16x256xf32>
    %c0_45 = arith.constant 0 : index
    %c0_46 = arith.constant 0 : index
    %95 = vector.load %arg8[%c0_45, %c0_46] : memref<32x16xbf16, #tpu.memory_space<vmem>>, vector<32x16xbf16>
    %96 = arith.truncf %94 : vector<16x256xf32> to vector<16x256xbf16>
    %cst_47 = arith.constant dense<0.000000e+00> : vector<32x256xf32>
    %97 = tpu.matmul %95, %96, %cst_47 {dimension_numbers = #tpu.dot_dimension_numbers<[1], [0], [0], [1], [0, 0, 1, 1], [], []>} : vector<32x16xbf16>, vector<16x256xbf16>, vector<32x256xf32> -> vector<32x256xf32>
    %98 = arith.truncf %97 : vector<32x256xf32> to vector<32x256xbf16>
    %c0_48 = arith.constant 0 : index
    %c0_49 = arith.constant 0 : index
    %99 = vector.load %arg9[%c0_48, %c0_49] : memref<256x128xbf16, #tpu.memory_space<vmem>>, vector<256x128xbf16>
    %cst_50 = arith.constant dense<0.000000e+00> : vector<32x128xf32>
    %100 = tpu.matmul %98, %99, %cst_50 {dimension_numbers = #tpu.dot_dimension_numbers<[1], [0], [0], [1], [0, 0, 1, 1], [], []>} : vector<32x256xbf16>, vector<256x128xbf16>, vector<32x128xf32> -> vector<32x128xf32>
    %101 = vector.extract_strided_slice %100 {offsets = [0, 0], sizes = [8, 128], strides = [1, 1]} : vector<32x128xf32> to vector<8x128xf32>
    %102 = vector.extract_strided_slice %100 {offsets = [8, 0], sizes = [8, 128], strides = [1, 1]} : vector<32x128xf32> to vector<8x128xf32>
    %103 = vector.extract_strided_slice %100 {offsets = [16, 0], sizes = [8, 128], strides = [1, 1]} : vector<32x128xf32> to vector<8x128xf32>
    %104 = vector.extract_strided_slice %100 {offsets = [24, 0], sizes = [8, 128], strides = [1, 1]} : vector<32x128xf32> to vector<8x128xf32>
    %105 = tpu.concatenate %101, %102, %103, %104 in 1 : vector<8x128xf32>, vector<8x128xf32>, vector<8x128xf32>, vector<8x128xf32> -> vector<8x512xf32>
    %106 = arith.truncf %105 : vector<8x512xf32> to vector<8x512xbf16>
    %c0_51 = arith.constant 0 : index
    %c0_52 = arith.constant 0 : index
    %107 = vector.load %arg10[%c0_51, %c0_52] : memref<512x128xbf16, #tpu.memory_space<vmem>>, vector<512x128xbf16>
    %cst_53 = arith.constant dense<0.000000e+00> : vector<8x128xf32>
    %108 = tpu.matmul %106, %107, %cst_53 {dimension_numbers = #tpu.dot_dimension_numbers<[1], [0], [0], [1], [0, 0, 1, 1], [], []>} : vector<8x512xbf16>, vector<512x128xbf16>, vector<8x128xf32> -> vector<8x128xf32>
    %c0_54 = arith.constant 0 : index
    %c0_55 = arith.constant 0 : index
    %109 = vector.load %arg11[%c0_54, %c0_55] : memref<1x128xf32, #tpu.memory_space<vmem>>, vector<1x128xf32>
    %110 = vector.broadcast %109 : vector<1x128xf32> to vector<8x128xf32>
    %111 = arith.addf %108, %110 : vector<8x128xf32>
    %cst_56 = arith.constant 0.000000e+00 : f32
    %112 = vector.broadcast %cst_56 : f32 to vector<8x128xf32>
    %113 = arith.maximumf %111, %112 : vector<8x128xf32>
    %114 = arith.truncf %113 : vector<8x128xf32> to vector<8x128xbf16>
    %c0_57 = arith.constant 0 : index
    %c0_58 = arith.constant 0 : index
    %115 = vector.load %arg12[%c0_57, %c0_58] : memref<128x256xbf16, #tpu.memory_space<vmem>>, vector<128x256xbf16>
    %cst_59 = arith.constant dense<0.000000e+00> : vector<8x256xf32>
    %116 = tpu.matmul %114, %115, %cst_59 {dimension_numbers = #tpu.dot_dimension_numbers<[1], [0], [0], [1], [0, 0, 1, 1], [], []>} : vector<8x128xbf16>, vector<128x256xbf16>, vector<8x256xf32> -> vector<8x256xf32>
    %c0_60 = arith.constant 0 : index
    %c0_61 = arith.constant 0 : index
    %117 = vector.load %arg13[%c0_60, %c0_61] : memref<1x256xf32, #tpu.memory_space<vmem>>, vector<1x256xf32>
    %118 = vector.broadcast %117 : vector<1x256xf32> to vector<8x256xf32>
    %119 = arith.addf %116, %118 : vector<8x256xf32>
    %cst_62 = arith.constant 0.000000e+00 : f32
    %120 = vector.broadcast %cst_62 : f32 to vector<8x256xf32>
    %121 = arith.maximumf %119, %120 : vector<8x256xf32>
    %122 = vector.extract_strided_slice %121 {offsets = [0, 0], sizes = [8, 128], strides = [1, 1]} : vector<8x256xf32> to vector<8x128xf32>
    %123 = vector.extract_strided_slice %121 {offsets = [0, 128], sizes = [8, 128], strides = [1, 1]} : vector<8x256xf32> to vector<8x128xf32>
    %c0_63 = arith.constant 0 : index
    %c0_64 = arith.constant 0 : index
    %124 = vector.load %arg14[%c0_63, %c0_64] : memref<1x128xf32, #tpu.memory_space<vmem>>, vector<1x128xf32>
    %125 = vector.broadcast %124 : vector<1x128xf32> to vector<8x128xf32>
    %126 = arith.mulf %122, %125 : vector<8x128xf32>
    %cst_65 = arith.constant dense<0.000000e+00> : vector<8xf32>
    %127 = vector.multi_reduction <add>, %126, %cst_65 [1] : vector<8x128xf32> to vector<8xf32>
    %128 = vector.shape_cast %127 : vector<8xf32> to vector<8x1xf32>
    %c0_66 = arith.constant 0 : index
    %c0_67 = arith.constant 0 : index
    %129 = vector.load %arg15[%c0_66, %c0_67] : memref<1x1xf32, #tpu.memory_space<vmem>>, vector<1x1xf32>
    %130 = vector.broadcast %129 : vector<1x1xf32> to vector<8x1xf32>
    %131 = arith.addf %128, %130 : vector<8x1xf32>
    %132 = arith.truncf %123 : vector<8x128xf32> to vector<8x128xbf16>
    %c0_68 = arith.constant 0 : index
    %c0_69 = arith.constant 0 : index
    %133 = vector.load %arg16[%c0_68, %c0_69] : memref<128x128xbf16, #tpu.memory_space<vmem>>, vector<128x128xbf16>
    %cst_70 = arith.constant dense<0.000000e+00> : vector<8x128xf32>
    %134 = tpu.matmul %132, %133, %cst_70 {dimension_numbers = #tpu.dot_dimension_numbers<[1], [0], [0], [1], [0, 0, 1, 1], [], []>} : vector<8x128xbf16>, vector<128x128xbf16>, vector<8x128xf32> -> vector<8x128xf32>
    %c0_71 = arith.constant 0 : index
    %c0_72 = arith.constant 0 : index
    %135 = vector.load %arg17[%c0_71, %c0_72] : memref<1x128xf32, #tpu.memory_space<vmem>>, vector<1x128xf32>
    %136 = vector.broadcast %135 : vector<1x128xf32> to vector<8x128xf32>
    %137 = arith.addf %134, %136 : vector<8x128xf32>
    %138 = vector.broadcast %131 : vector<8x1xf32> to vector<8x128xf32>
    %139 = arith.addf %138, %137 : vector<8x128xf32>
    %cst_73 = arith.constant dense<0.000000e+00> : vector<8xf32>
    %140 = vector.multi_reduction <add>, %137, %cst_73 [1] : vector<8x128xf32> to vector<8xf32>
    %141 = vector.shape_cast %140 : vector<8xf32> to vector<8x1xf32>
    %cst_74 = arith.constant 5.000000e-01 : f32
    %142 = vector.broadcast %cst_74 : f32 to vector<8x1xf32>
    %143 = arith.mulf %141, %142 : vector<8x1xf32>
    %144 = vector.broadcast %143 : vector<8x1xf32> to vector<8x128xf32>
    %145 = arith.subf %139, %144 : vector<8x128xf32>
    %146 = vector.extract_strided_slice %145 {offsets = [0, 0], sizes = [2, 128], strides = [1, 1]} : vector<8x128xf32> to vector<2x128xf32>
    %c0_75 = arith.constant 0 : index
    %c0_76 = arith.constant 0 : index
    %c0_77 = arith.constant 0 : index
    %147 = vector.load %arg18[%c0_75, %c0_76, %c0_77] : memref<1x2x128xf32, #tpu.memory_space<vmem>>, vector<1x2x128xf32>
    %148 = vector.shape_cast %147 : vector<1x2x128xf32> to vector<2x128xf32>
    %149 = vector.shape_cast %146 : vector<2x128xf32> to vector<1x2x128xf32>
    tpu.vector_store %arg18[%c0_75, %c0_76, %c0_77], %149 {strides = array<i32>} : memref<1x2x128xf32, #tpu.memory_space<vmem>>, vector<1x2x128xf32>,
    return
  }
  func.func @transform_0(%arg0: i32) -> (i32, i32) {
    %c0_i32 = arith.constant 0 : i32
    %c0_i32_0 = arith.constant 0 : i32
    return %arg0, %c0_i32 : i32, i32
  }
  func.func @transform_1(%arg0: i32) -> (i32, i32, i32) {
    %c0_i32 = arith.constant 0 : i32
    %c0_i32_0 = arith.constant 0 : i32
    %c0_i32_1 = arith.constant 0 : i32
    %c0_i32_2 = arith.constant 0 : i32
    return %c0_i32, %c0_i32_0, %c0_i32_1 : i32, i32, i32
  }
  func.func @transform_2(%arg0: i32) -> (i32, i32) {
    %c0_i32 = arith.constant 0 : i32
    %c0_i32_0 = arith.constant 0 : i32
    %c0_i32_1 = arith.constant 0 : i32
    return %c0_i32, %c0_i32_0 : i32, i32
  }
  func.func @transform_3(%arg0: i32) -> (i32, i32) {
    %c0_i32 = arith.constant 0 : i32
    %c0_i32_0 = arith.constant 0 : i32
    %c0_i32_1 = arith.constant 0 : i32
    return %c0_i32, %c0_i32_0 : i32, i32
  }
  func.func @transform_4(%arg0: i32) -> (i32, i32) {
    %c0_i32 = arith.constant 0 : i32
    %c0_i32_0 = arith.constant 0 : i32
    %c0_i32_1 = arith.constant 0 : i32
    return %c0_i32, %c0_i32_0 : i32, i32
  }
  func.func @transform_5(%arg0: i32) -> (i32, i32, i32) {
    %c0_i32 = arith.constant 0 : i32
    %c0_i32_0 = arith.constant 0 : i32
    %c0_i32_1 = arith.constant 0 : i32
    %c0_i32_2 = arith.constant 0 : i32
    return %c0_i32, %c0_i32_0, %c0_i32_1 : i32, i32, i32
  }
  func.func @transform_6(%arg0: i32) -> (i32, i32) {
    %c0_i32 = arith.constant 0 : i32
    %c0_i32_0 = arith.constant 0 : i32
    %c0_i32_1 = arith.constant 0 : i32
    return %c0_i32, %c0_i32_0 : i32, i32
  }
  func.func @transform_7(%arg0: i32) -> (i32, i32) {
    %c0_i32 = arith.constant 0 : i32
    %c0_i32_0 = arith.constant 0 : i32
    %c0_i32_1 = arith.constant 0 : i32
    return %c0_i32, %c0_i32_0 : i32, i32
  }
  func.func @transform_8(%arg0: i32) -> (i32, i32) {
    %c0_i32 = arith.constant 0 : i32
    %c0_i32_0 = arith.constant 0 : i32
    %c0_i32_1 = arith.constant 0 : i32
    return %c0_i32, %c0_i32_0 : i32, i32
  }
  func.func @transform_9(%arg0: i32) -> (i32, i32) {
    %c0_i32 = arith.constant 0 : i32
    %c0_i32_0 = arith.constant 0 : i32
    %c0_i32_1 = arith.constant 0 : i32
    return %c0_i32, %c0_i32_0 : i32, i32
  }
  func.func @transform_10(%arg0: i32) -> (i32, i32) {
    %c0_i32 = arith.constant 0 : i32
    %c0_i32_0 = arith.constant 0 : i32
    %c0_i32_1 = arith.constant 0 : i32
    return %c0_i32, %c0_i32_0 : i32, i32
  }
  func.func @transform_11(%arg0: i32) -> (i32, i32) {
    %c0_i32 = arith.constant 0 : i32
    %c0_i32_0 = arith.constant 0 : i32
    %c0_i32_1 = arith.constant 0 : i32
    return %c0_i32, %c0_i32_0 : i32, i32
  }
  func.func @transform_12(%arg0: i32) -> (i32, i32) {
    %c0_i32 = arith.constant 0 : i32
    %c0_i32_0 = arith.constant 0 : i32
    %c0_i32_1 = arith.constant 0 : i32
    return %c0_i32, %c0_i32_0 : i32, i32
  }
  func.func @transform_13(%arg0: i32) -> (i32, i32) {
    %c0_i32 = arith.constant 0 : i32
    %c0_i32_0 = arith.constant 0 : i32
    %c0_i32_1 = arith.constant 0 : i32
    return %c0_i32, %c0_i32_0 : i32, i32
  }
  func.func @transform_14(%arg0: i32) -> (i32, i32) {
    %c0_i32 = arith.constant 0 : i32
    %c0_i32_0 = arith.constant 0 : i32
    %c0_i32_1 = arith.constant 0 : i32
    return %c0_i32, %c0_i32_0 : i32, i32
  }
  func.func @transform_15(%arg0: i32) -> (i32, i32) {
    %c0_i32 = arith.constant 0 : i32
    %c0_i32_0 = arith.constant 0 : i32
    %c0_i32_1 = arith.constant 0 : i32
    return %c0_i32, %c0_i32_0 : i32, i32
  }
  func.func @transform_16(%arg0: i32) -> (i32, i32) {
    %c0_i32 = arith.constant 0 : i32
    %c0_i32_0 = arith.constant 0 : i32
    %c0_i32_1 = arith.constant 0 : i32
    return %c0_i32, %c0_i32_0 : i32, i32
  }
  func.func @transform_17(%arg0: i32) -> (i32, i32, i32) {
    %c0_i32 = arith.constant 0 : i32
    %c0_i32_0 = arith.constant 0 : i32
    %c0_i32_1 = arith.constant 0 : i32
    return %arg0, %c0_i32, %c0_i32_0 : i32, i32, i32
  }
}

</mosaic_0001>

<llo_original>
// kernel: forward.1
$region0: #{forward.1}
  #allocation0 [shape = 'u32[]', space=smem, size = 0x4, offset = 0x4, fixed_abs, tag = 'smem constant byte address 0x4 - core index']
  #allocation1 [shape = 'u32[72,128]{1,0:T(1,128)}', space=vmem, size = 0x9000, scoped, tag = 'internal scratch']
  #allocation2 [shape = 'f32[1,1]{1,0:T(1,128)S(1)}', space=vmem, size = 0x200, scoped, tag = 'scoped memory for forward.1']
  %s0 = inlined_call_operand.vmem [shape: f32[32,64], index: 0, kind: input, shape index: {}]
  %s1 = inlined_call_operand.hbm [shape: bf16[3,64,256], index: 1, kind: input, shape index: {}]
  %s2 = inlined_call_operand.vmem [shape: f32[2,256], index: 2, kind: input, shape index: {}]
  %s3 = inlined_call_operand.vmem [shape: bf16[16,32], index: 3, kind: input, shape index: {}]
  %s4 = inlined_call_operand.hbm [shape: bf16[256,128], index: 4, kind: input, shape index: {}]
  %s5 = inlined_call_operand.vmem [shape: bf16[3,128,256], index: 5, kind: input, shape index: {}]
  %s6 = inlined_call_operand.vmem [shape: f32[2,256], index: 6, kind: input, shape index: {}]
  %s7 = inlined_call_operand.vmem [shape: bf16[32,16], index: 7, kind: input, shape index: {}]
  %s8 = inlined_call_operand.hbm [shape: bf16[256,128], index: 8, kind: input, shape index: {}]
  %s9 = inlined_call_operand.hbm [shape: bf16[512,128], index: 9, kind: input, shape index: {}]
  %s10 = inlined_call_operand.vmem [shape: f32[1,128], index: 10, kind: input, shape index: {}]
  %s11 = inlined_call_operand.vmem [shape: bf16[128,256], index: 11, kind: input, shape index: {}]
  %s12 = inlined_call_operand.vmem [shape: f32[1,256], index: 12, kind: input, shape index: {}]
  %s13 = inlined_call_operand.vmem [shape: f32[1,128], index: 13, kind: input, shape index: {}]
  %s14 = inlined_call_operand.<no memory space> [shape: f32[1,1], index: 14, kind: input, shape index: {}]
  %s15 = inlined_call_operand.hbm [shape: bf16[128,128], index: 15, kind: input, shape index: {}]
  %s16 = inlined_call_operand.vmem [shape: f32[1,128], index: 16, kind: input, shape index: {}]
  %s17 = inlined_call_operand.hbm [shape: f32[1,2,128], index: 17, kind: output, shape index: {}]
  %s18 = sld [smem:[#allocation0]]
  $region98: #{forward.1} parent=0
    _
  %s20 = ssub.s32 1, %s18
  %s21 = scalar_select 0, %s20, %s18
  %v22 = vstv %s14
  %23 = vst [vmem:[#allocation2] sm:$0x1] %v22
  $region1: #{forward.1} parent=0
    #allocation3 [shape = 'u8[98304]{0}', space=vmem, size = 0x18000, scoped, tag = 'input window, operand 1, single buffered']
    #allocation4 [shape = 's32[1]{0}', space=sflag, size = 0x4, scoped, tag = 'scoped memory for forward.1']
    #allocation5 [shape = 's32[1]{0}', space=sflag, size = 0x4, scoped, tag = 'scoped memory for forward.1']
    #allocation6 [shape = 'u8[65536]{0}', space=vmem, size = 0x10000, scoped, tag = 'input window, operand 4, single buffered']
    #allocation7 [shape = 's32[1]{0}', space=sflag, size = 0x4, scoped, tag = 'scoped memory for forward.1']
    #allocation8 [shape = 'u8[65536]{0}', space=vmem, size = 0x10000, scoped, tag = 'input window, operand 8, single buffered']
    #allocation9 [shape = 'u8[131072]{0}', space=vmem, size = 0x20000, scoped, tag = 'input window, operand 9, single buffered']
    #allocation10 [shape = 's32[1]{0}', space=sflag, size = 0x4, scoped, tag = 'scoped memory for forward.1']
    #allocation11 [shape = 'u8[32768]{0}', space=vmem, size = 0x8000, scoped, tag = 'input window, operand 15, single buffered']
    #allocation12 [shape = 'u8[1024]{0}', space=vmem, size = 0x400, scoped, tag = 'output window, operand 0, single buffered']
    %24 = vsyncpa [#allocation4], 0
    %25 = vsyncpa [#allocation7], 0
    %26 = vsyncpa [#allocation10], 0
    %27 = vsyncpa [#allocation5], 0
    // Predicated region
    $region2: #{forward.1} parent=1 // pred_check
      _
    $region3: #{forward.1} parent=1 // pred_check_branch
      %29 = sbr.rel (0) target = $region5
    $region4: #{forward.1} parent=1 // pred_region
      _
    $region5: #{forward.1} parent=1 // pred_fallthru
      _
    // Predicated region
    $region6: #{forward.1} parent=1 // pred_check
      _
    $region7: #{forward.1} parent=1 // pred_check_branch
      %31 = sbr.rel (0) target = $region9
    $region8: #{forward.1} parent=1 // pred_region
      %33 = vsyncadd [#allocation4], 0
      %s34 = sshll.u32 %s1, 4
      %s35 = int_to_ptr.hbm [resolvable:$true] %s34
      %s36 = sshll.u32 [#allocation3], 4
      %s37 = int_to_ptr.vmem [resolvable:$true] %s36
      %42 = dma.hbm_to_vmem [thread:$0]  %s35, 3072, %s37, [#allocation4], 128, 128, 8
    $region9: #{forward.1} parent=1 // pred_fallthru
      _
    // Predicated region
    $region10: #{forward.1} parent=1 // pred_check
      _
    $region11: #{forward.1} parent=1 // pred_check_branch
      %44 = sbr.rel (0) target = $region13
    $region12: #{forward.1} parent=1 // pred_region
      _
    $region13: #{forward.1} parent=1 // pred_fallthru
      _
    // Predicated region
    $region14: #{forward.1} parent=1 // pred_check
      _
    $region15: #{forward.1} parent=1 // pred_check_branch
      %46 = sbr.rel (0) target = $region17
    $region16: #{forward.1} parent=1 // pred_region
      _
    $region17: #{forward.1} parent=1 // pred_fallthru
      _
    // Predicated region
    $region18: #{forward.1} parent=1 // pred_check
      _
    $region19: #{forward.1} parent=1 // pred_check_branch
      %48 = sbr.rel (0) target = $region21
    $region20: #{forward.1} parent=1 // pred_region
      %50 = vsyncadd [#allocation7], 0
      %s51 = sshll.u32 %s4, 4
      %s52 = int_to_ptr.hbm [resolvable:$true] %s51
      %s53 = sshll.u32 [#allocation6], 4
      %s54 = int_to_ptr.vmem [resolvable:$true] %s53
      %59 = dma.hbm_to_vmem [thread:$0]  %s52, 2048, %s54, [#allocation7], 64, 64, 4
    $region21: #{forward.1} parent=1 // pred_fallthru
      _
    // Predicated region
    $region22: #{forward.1} parent=1 // pred_check
      _
    $region23: #{forward.1} parent=1 // pred_check_branch
      %61 = sbr.rel (0) target = $region25
    $region24: #{forward.1} parent=1 // pred_region
      _
    $region25: #{forward.1} parent=1 // pred_fallthru
      _
    // Predicated region
    $region26: #{forward.1} parent=1 // pred_check
      _
    $region27: #{forward.1} parent=1 // pred_check_branch
      %63 = sbr.rel (0) target = $region29
    $region28: #{forward.1} parent=1 // pred_region
      _
    $region29: #{forward.1} parent=1 // pred_fallthru
      _
    // Predicated region
    $region30: #{forward.1} parent=1 // pred_check
      _
    $region31: #{forward.1} parent=1 // pred_check_branch
      %65 = sbr.rel (0) target = $region33
    $region32: #{forward.1} parent=1 // pred_region
      _
    $region33: #{forward.1} parent=1 // pred_fallthru
      _
    // Predicated region
    $region34: #{forward.1} parent=1 // pred_check
      _
    $region35: #{forward.1} parent=1 // pred_check_branch
      %67 = sbr.rel (0) target = $region37
    $region36: #{forward.1} parent=1 // pred_region
      %69 = vsyncadd [#allocation7], 0
      %s70 = sshll.u32 %s8, 4
      %s71 = int_to_ptr.hbm [resolvable:$true] %s70
      %s72 = sshll.u32 [#allocation8], 4
      %s73 = int_to_ptr.vmem [resolvable:$true] %s72
      %78 = dma.hbm_to_vmem [thread:$0]  %s71, 2048, %s73, [#allocation7], 64, 64, 4
    $region37: #{forward.1} parent=1 // pred_fallthru
      _
    // Predicated region
    $region38: #{forward.1} parent=1 // pred_check
      _
    $region39: #{forward.1} parent=1 // pred_check_branch
      %80 = sbr.rel (0) target = $region41
    $region40: #{forward.1} parent=1 // pred_region
      %82 = vsyncadd [#allocation10], 0
      %s83 = sshll.u32 %s9, 4
      %s84 = int_to_ptr.hbm [resolvable:$true] %s83
      %s85 = sshll.u32 [#allocation9], 4
      %s86 = int_to_ptr.vmem [resolvable:$true] %s85
      %91 = dma.hbm_to_vmem [thread:$0]  %s84, 4096, %s86, [#allocation10], 64, 64, 4
    $region41: #{forward.1} parent=1 // pred_fallthru
      _
    // Predicated region
    $region42: #{forward.1} parent=1 // pred_check
      _
    $region43: #{forward.1} parent=1 // pred_check_branch
      %93 = sbr.rel (0) target = $region45
    $region44: #{forward.1} parent=1 // pred_region
      _
    $region45: #{forward.1} parent=1 // pred_fallthru
      _
    // Predicated region
    $region46: #{forward.1} parent=1 // pred_check
      _
    $region47: #{forward.1} parent=1 // pred_check_branch
      %95 = sbr.rel (0) target = $region49
    $region48: #{forward.1} parent=1 // pred_region
      _
    $region49: #{forward.1} parent=1 // pred_fallthru
      _
    // Predicated region
    $region50: #{forward.1} parent=1 // pred_check
      _
    $region51: #{forward.1} parent=1 // pred_check_branch
      %97 = sbr.rel (0) target = $region53
    $region52: #{forward.1} parent=1 // pred_region
      _
    $region53: #{forward.1} parent=1 // pred_fallthru
      _
    // Predicated region
    $region54: #{forward.1} parent=1 // pred_check
      _
    $region55: #{forward.1} parent=1 // pred_check_branch
      %99 = sbr.rel (0) target = $region57
    $region56: #{forward.1} parent=1 // pred_region
      _
    $region57: #{forward.1} parent=1 // pred_fallthru
      _
    // Predicated region
    $region58: #{forward.1} parent=1 // pred_check
      _
    $region59: #{forward.1} parent=1 // pred_check_branch
      %101 = sbr.rel (0) target = $region61
    $region60: #{forward.1} parent=1 // pred_region
      _
    $region61: #{forward.1} parent=1 // pred_fallthru
      _
    // Predicated region
    $region62: #{forward.1} parent=1 // pred_check
      _
    $region63: #{forward.1} parent=1 // pred_check_branch
      %103 = sbr.rel (0) target = $region65
    $region64: #{forward.1} parent=1 // pred_region
      %105 = vsyncadd [#allocation10], 0
      %s106 = sshll.u32 %s15, 4
      %s107 = int_to_ptr.hbm [resolvable:$true] %s106
      %s108 = sshll.u32 [#allocation11], 4
      %s109 = int_to_ptr.vmem [resolvable:$true] %s108
      %114 = dma.hbm_to_vmem [thread:$0]  %s107, 1024, %s109, [#allocation10], 64, 64, 4
    $region65: #{forward.1} parent=1 // pred_fallthru
      _
    // Predicated region
    $region66: #{forward.1} parent=1 // pred_check
      _
    $region67: #{forward.1} parent=1 // pred_check_branch
      %116 = sbr.rel (0) target = $region69
    $region68: #{forward.1} parent=1 // pred_region
      _
    $region69: #{forward.1} parent=1 // pred_fallthru
      _
    // Predicated region
    $region70: #{forward.1} parent=1 // pred_check
      _
    $region71: #{forward.1} parent=1 // pred_check_branch
      %118 = sbr.rel (0) target = $region73
    $region72: #{forward.1} parent=1 // pred_region
      %120 = dma.done [#allocation4], 3072
    $region73: #{forward.1} parent=1 // pred_fallthru
      _
    // Predicated region
    $region74: #{forward.1} parent=1 // pred_check
      _
    $region75: #{forward.1} parent=1 // pred_check_branch
      %122 = sbr.rel (0) target = $region77
    $region76: #{forward.1} parent=1 // pred_region
      %124 = dma.done [#allocation7], 2048
    $region77: #{forward.1} parent=1 // pred_fallthru
      _
    // Predicated region
    $region78: #{forward.1} parent=1 // pred_check
      _
    $region79: #{forward.1} parent=1 // pred_check_branch
      %126 = sbr.rel (0) target = $region81
    $region80: #{forward.1} parent=1 // pred_region
      %128 = dma.done [#allocation7], 2048
    $region81: #{forward.1} parent=1 // pred_fallthru
      _
    // Predicated region
    $region82: #{forward.1} parent=1 // pred_check
      _
    $region83: #{forward.1} parent=1 // pred_check_branch
      %130 = sbr.rel (0) target = $region85
    $region84: #{forward.1} parent=1 // pred_region
      %132 = dma.done [#allocation10], 4096
    $region85: #{forward.1} parent=1 // pred_fallthru
      _
    // Predicated region
    $region86: #{forward.1} parent=1 // pred_check
      _
    $region87: #{forward.1} parent=1 // pred_check_branch
      %134 = sbr.rel (0) target = $region89
    $region88: #{forward.1} parent=1 // pred_region
      %136 = dma.done [#allocation10], 1024
    $region89: #{forward.1} parent=1 // pred_fallthru
      _
    %v138 = vld [vmem:[%s0] sm:$0xff]
    %v139 = vld [vmem:[%s0 + $0x8] sm:$0xff]
    %v140 = vld [vmem:[%s0 + $0x10] sm:$0xff]
    %v141 = vld [vmem:[%s0 + $0x18] sm:$0xff]
    %v142 = vlaneseq
    %v143 = vshrl.u32 %v142, 7
    %v144 = vadd.s32 %v143, 8
    %v145 = vadd.s32 %v143, 16
    %v146 = vadd.s32 %v143, 24
    %v147 = vand.u32 %v143, 15
    %v148 = vand.u32 %v144, 15
    %v149 = vand.u32 %v145, 15
    %v150 = vand.u32 %v146, 15
    %vm151 = vcmp.gt.s32.totalorder %v147, 0
    %vm152 = vcmp.gt.s32.totalorder %v148, 0
    %vm153 = vcmp.gt.s32.totalorder %v149, 0
    %vm154 = vcmp.gt.s32.totalorder %v150, 0
    %v155 = vrot.slane %v138, 7
    %v156 = vrot.slane %v139, 7
    %v157 = vrot.slane %v140, 7
    %v158 = vrot.slane %v141, 7
    %vm159 = vcmp.lt.s32.totalorder %v143, 1
    %v160 = vsel %vm159, %v157, %v158
    %v161 = vsel %vm159, %v156, %v157
    %v162 = vsel %vm159, %v155, %v156
    %v163 = vsel %vm159, %v158, %v155
    %v164 = vsel %vm151, 1, 0
    %v165 = vsel %vm152, 1, 0
    %v166 = vsel %vm153, 1, 0
    %v167 = vsel %vm154, 1, 0
    %vm168 = vcmp.eq.s32.totalorder %v164, 1
    %vm169 = vcmp.eq.s32.totalorder %v165, 1
    %vm170 = vcmp.eq.s32.totalorder %v166, 1
    %vm171 = vcmp.eq.s32.totalorder %v167, 1
    %v172 = vsel %vm168, %v163, 0.0
    %v173 = vsel %vm169, %v162, 0.0
    %v174 = vsel %vm170, %v161, 0.0
    %v175 = vsel %vm171, %v160, 0.0
    %vm176 = vcmp.lt.s32.totalorder %v147, 15
    %vm177 = vcmp.lt.s32.totalorder %v148, 15
    %vm178 = vcmp.lt.s32.totalorder %v149, 15
    %vm179 = vcmp.lt.s32.totalorder %v150, 15
    %v180 = vrot.slane %v138, 1
    %v181 = vrot.slane %v139, 1
    %v182 = vrot.slane %v140, 1
    %v183 = vrot.slane %v141, 1
    %vm184 = vcmp.lt.s32.totalorder %v143, 7
    %v185 = vsel %vm184, %v182, %v183
    %v186 = vsel %vm184, %v181, %v182
    %v187 = vsel %vm184, %v180, %v181
    %v188 = vsel %vm184, %v183, %v180
    %v189 = vsel %vm176, 1, 0
    %v190 = vsel %vm177, 1, 0
    %v191 = vsel %vm178, 1, 0
    %v192 = vsel %vm179, 1, 0
    %vm193 = vcmp.eq.s32.totalorder %v189, 1
    %vm194 = vcmp.eq.s32.totalorder %v190, 1
    %vm195 = vcmp.eq.s32.totalorder %v191, 1
    %vm196 = vcmp.eq.s32.totalorder %v192, 1
    %v197 = vsel %vm193, %v187, 0.0
    %v198 = vsel %vm194, %v186, 0.0
    %v199 = vsel %vm195, %v185, 0.0
    %v200 = vsel %vm196, %v188, 0.0
    %v201 = vpack.c.bf16 %v173, %v172
    %v202 = vpack.c.bf16 %v175, %v174
    %v203 = vld [vmem:[#allocation3] sm:$0xff]
    %v204 = vld [vmem:[#allocation3 + $0x8] sm:$0xff]
    %v205 = vld [vmem:[#allocation3 + $0x10] sm:$0xff]
    %v206 = vld [vmem:[#allocation3 + $0x18] sm:$0xff]
    %v207 = vld [vmem:[#allocation3 + $0x20] sm:$0xff]
    %v208 = vld [vmem:[#allocation3 + $0x28] sm:$0xff]
    %v209 = vld [vmem:[#allocation3 + $0x30] sm:$0xff]
    %v210 = vld [vmem:[#allocation3 + $0x38] sm:$0xff]
    %v211 = vpack.c.bf16 %v139, %v138
    %v212 = vpack.c.bf16 %v141, %v140
    %s213 = scalar_lea.vmem [#allocation3], 64
    %v214 = vld [vmem:[%s213] sm:$0xff]
    %v215 = vld [vmem:[%s213 + $0x8] sm:$0xff]
    %v216 = vld [vmem:[%s213 + $0x10] sm:$0xff]
    %v217 = vld [vmem:[%s213 + $0x18] sm:$0xff]
    %v218 = vld [vmem:[%s213 + $0x20] sm:$0xff]
    %v219 = vld [vmem:[%s213 + $0x28] sm:$0xff]
    %v220 = vld [vmem:[%s213 + $0x30] sm:$0xff]
    %v221 = vld [vmem:[%s213 + $0x38] sm:$0xff]
    %v230 = vunpack.c.l.b16 %v214
    %v231 = vunpack.c.h.b16 %v214
    %v232 = vunpack.c.l.b16 %v215
    %v233 = vunpack.c.h.b16 %v215
    %v234 = vunpack.c.l.b16 %v216
    %v235 = vunpack.c.h.b16 %v216
    %v236 = vunpack.c.l.b16 %v217
    %v237 = vunpack.c.h.b16 %v217
    %v238 = vunpack.c.l.b16 %v218
    %v239 = vunpack.c.h.b16 %v218
    %v240 = vunpack.c.l.b16 %v219
    %v241 = vunpack.c.h.b16 %v219
    %v242 = vunpack.c.l.b16 %v220
    %v243 = vunpack.c.h.b16 %v220
    %v244 = vunpack.c.l.b16 %v221
    %v245 = vunpack.c.h.b16 %v221
    %v246 = vpack.c.b16 %v232, %v230
    %v247 = vpack.c.b16 %v233, %v231
    %v248 = vpack.c.b16 %v236, %v234
    %v249 = vpack.c.b16 %v237, %v235
    %v250 = vpack.c.b16 %v240, %v238
    %v251 = vpack.c.b16 %v241, %v239
    %v252 = vpack.c.b16 %v244, %v242
    %v253 = vpack.c.b16 %v245, %v243
    %vm262 = vcmask 523264
    %v264 = vsel %vm262, %v211, 0
    %v267 = vsel %vm262, %v212, 0
    %269 = vmatpush.bf16.msra.mxu0 0
    %270 = vmatpush.bf16.msra.mxu0 0
    %271 = vmatpush.bf16.msra.mxu0 0
    %272 = vmatpush.bf16.msra.mxu0 0
    %273 = vmatpush.bf16.msra.mxu0 %v252
    %274 = vmatpush.bf16.msra.mxu0 %v250
    %275 = vmatpush.bf16.msra.mxu0 %v248
    %276 = vmatpush.bf16.msra.mxu0 %v246
    %277 = vmatmul.bf16.gmra.mxu0 %v264
    %v278 = vpop.f32.mrf.mxu0
    %v279 = vadd.f32 0.0, %v278
    %v280 = vpop.f32.mrf.mxu0
    %v281 = vadd.f32 0.0, %v280
    %282 = vmatmul.bf16.gmra.mxu0 %v267
    %v283 = vpop.f32.mrf.mxu0
    %v284 = vadd.f32 0.0, %v283
    %v285 = vpop.f32.mrf.mxu0
    %v286 = vadd.f32 0.0, %v285
    %287 = vdwg.mxu0
    %288 = vmatpush.bf16.msra.mxu0 0
    %289 = vmatpush.bf16.msra.mxu0 0
    %290 = vmatpush.bf16.msra.mxu0 0
    %291 = vmatpush.bf16.msra.mxu0 0
    %292 = vmatpush.bf16.msra.mxu0 %v253
    %293 = vmatpush.bf16.msra.mxu0 %v251
    %294 = vmatpush.bf16.msra.mxu0 %v249
    %295 = vmatpush.bf16.msra.mxu0 %v247
    %296 = vmatmul.bf16.gmra.mxu0 %v264
    %v297 = vpop.f32.mrf.mxu0
    %v298 = vadd.f32 0.0, %v297
    %v299 = vpop.f32.mrf.mxu0
    %v300 = vadd.f32 0.0, %v299
    %301 = vmatmul.bf16.gmra.mxu0 %v267
    %v302 = vpop.f32.mrf.mxu0
    %v303 = vadd.f32 0.0, %v302
    %v304 = vpop.f32.mrf.mxu0
    %v305 = vadd.f32 0.0, %v304
    %306 = vdwg.mxu0
    %v315 = vunpack.c.l.b16 %v203
    %v316 = vunpack.c.h.b16 %v203
    %v317 = vunpack.c.l.b16 %v204
    %v318 = vunpack.c.h.b16 %v204
    %v319 = vunpack.c.l.b16 %v205
    %v320 = vunpack.c.h.b16 %v205
    %v321 = vunpack.c.l.b16 %v206
    %v322 = vunpack.c.h.b16 %v206
    %v323 = vunpack.c.l.b16 %v207
    %v324 = vunpack.c.h.b16 %v207
    %v325 = vunpack.c.l.b16 %v208
    %v326 = vunpack.c.h.b16 %v208
    %v327 = vunpack.c.l.b16 %v209
    %v328 = vunpack.c.h.b16 %v209
    %v329 = vunpack.c.l.b16 %v210
    %v330 = vunpack.c.h.b16 %v210
    %v331 = vpack.c.b16 %v317, %v315
    %v332 = vpack.c.b16 %v318, %v316
    %v333 = vpack.c.b16 %v321, %v319
    %v334 = vpack.c.b16 %v322, %v320
    %v335 = vpack.c.b16 %v325, %v323
    %v336 = vpack.c.b16 %v326, %v324
    %v337 = vpack.c.b16 %v329, %v327
    %v338 = vpack.c.b16 %v330, %v328
    %v348 = vsel %vm262, %v201, 0
    %v351 = vsel %vm262, %v202, 0
    %353 = vmatpush.bf16.msra.mxu0 0
    %354 = vmatpush.bf16.msra.mxu0 0
    %355 = vmatpush.bf16.msra.mxu0 0
    %356 = vmatpush.bf16.msra.mxu0 0
    %357 = vmatpush.bf16.msra.mxu0 %v337
    %358 = vmatpush.bf16.msra.mxu0 %v335
    %359 = vmatpush.bf16.msra.mxu0 %v333
    %360 = vmatpush.bf16.msra.mxu0 %v331
    %361 = vmatmul.bf16.gmra.mxu0 %v348
    %v362 = vpop.f32.mrf.mxu0
    %v363 = vadd.f32 %v279, %v362
    %v364 = vpop.f32.mrf.mxu0
    %v365 = vadd.f32 %v281, %v364
    %366 = vmatmul.bf16.gmra.mxu0 %v351
    %v367 = vpop.f32.mrf.mxu0
    %v368 = vadd.f32 %v284, %v367
    %v369 = vpop.f32.mrf.mxu0
    %v370 = vadd.f32 %v286, %v369
    %371 = vdwg.mxu0
    %372 = vmatpush.bf16.msra.mxu0 0
    %373 = vmatpush.bf16.msra.mxu0 0
    %374 = vmatpush.bf16.msra.mxu0 0
    %375 = vmatpush.bf16.msra.mxu0 0
    %376 = vmatpush.bf16.msra.mxu0 %v338
    %377 = vmatpush.bf16.msra.mxu0 %v336
    %378 = vmatpush.bf16.msra.mxu0 %v334
    %379 = vmatpush.bf16.msra.mxu0 %v332
    %380 = vmatmul.bf16.gmra.mxu0 %v348
    %v381 = vpop.f32.mrf.mxu0
    %v382 = vadd.f32 %v298, %v381
    %v383 = vpop.f32.mrf.mxu0
    %v384 = vadd.f32 %v300, %v383
    %385 = vmatmul.bf16.gmra.mxu0 %v351
    %v386 = vpop.f32.mrf.mxu0
    %v387 = vadd.f32 %v303, %v386
    %v388 = vpop.f32.mrf.mxu0
    %v389 = vadd.f32 %v305, %v388
    %390 = vdwg.mxu0
    %v391 = vpack.c.bf16 %v198, %v197
    %v392 = vpack.c.bf16 %v200, %v199
    %s393 = scalar_lea.vmem [#allocation3], 128
    %v394 = vld [vmem:[%s393] sm:$0xff]
    %v395 = vld [vmem:[%s393 + $0x8] sm:$0xff]
    %v396 = vld [vmem:[%s393 + $0x10] sm:$0xff]
    %v397 = vld [vmem:[%s393 + $0x18] sm:$0xff]
    %v398 = vld [vmem:[%s393 + $0x20] sm:$0xff]
    %v399 = vld [vmem:[%s393 + $0x28] sm:$0xff]
    %v400 = vld [vmem:[%s393 + $0x30] sm:$0xff]
    %v401 = vld [vmem:[%s393 + $0x38] sm:$0xff]
    %v410 = vunpack.c.l.b16 %v394
    %v411 = vunpack.c.h.b16 %v394
    %v412 = vunpack.c.l.b16 %v395
    %v413 = vunpack.c.h.b16 %v395
    %v414 = vunpack.c.l.b16 %v396
    %v415 = vunpack.c.h.b16 %v396
    %v416 = vunpack.c.l.b16 %v397
    %v417 = vunpack.c.h.b16 %v397
    %v418 = vunpack.c.l.b16 %v398
    %v419 = vunpack.c.h.b16 %v398
    %v420 = vunpack.c.l.b16 %v399
    %v421 = vunpack.c.h.b16 %v399
    %v422 = vunpack.c.l.b16 %v400
    %v423 = vunpack.c.h.b16 %v400
    %v424 = vunpack.c.l.b16 %v401
    %v425 = vunpack.c.h.b16 %v401
    %v426 = vpack.c.b16 %v412, %v410
    %v427 = vpack.c.b16 %v413, %v411
    %v428 = vpack.c.b16 %v416, %v414
    %v429 = vpack.c.b16 %v417, %v415
    %v430 = vpack.c.b16 %v420, %v418
    %v431 = vpack.c.b16 %v421, %v419
    %v432 = vpack.c.b16 %v424, %v422
    %v433 = vpack.c.b16 %v425, %v423
    %v443 = vsel %vm262, %v391, 0
    %v446 = vsel %vm262, %v392, 0
    %448 = vmatpush.bf16.msra.mxu0 0
    %449 = vmatpush.bf16.msra.mxu0 0
    %450 = vmatpush.bf16.msra.mxu0 0
    %451 = vmatpush.bf16.msra.mxu0 0
    %452 = vmatpush.bf16.msra.mxu0 %v432
    %453 = vmatpush.bf16.msra.mxu0 %v430
    %454 = vmatpush.bf16.msra.mxu0 %v428
    %455 = vmatpush.bf16.msra.mxu0 %v426
    %456 = vmatmul.bf16.gmra.mxu0 %v443
    %v457 = vpop.f32.mrf.mxu0
    %v458 = vadd.f32 0.0, %v457
    %v459 = vpop.f32.mrf.mxu0
    %v460 = vadd.f32 0.0, %v459
    %461 = vmatmul.bf16.gmra.mxu0 %v446
    %v462 = vpop.f32.mrf.mxu0
    %v463 = vadd.f32 0.0, %v462
    %v464 = vpop.f32.mrf.mxu0
    %v465 = vadd.f32 0.0, %v464
    %466 = vdwg.mxu0
    %467 = vmatpush.bf16.msra.mxu0 0
    %468 = vmatpush.bf16.msra.mxu0 0
    %469 = vmatpush.bf16.msra.mxu0 0
    %470 = vmatpush.bf16.msra.mxu0 0
    %471 = vmatpush.bf16.msra.mxu0 %v433
    %472 = vmatpush.bf16.msra.mxu0 %v431
    %473 = vmatpush.bf16.msra.mxu0 %v429
    %474 = vmatpush.bf16.msra.mxu0 %v427
    %475 = vmatmul.bf16.gmra.mxu0 %v443
    %v476 = vpop.f32.mrf.mxu0
    %v477 = vadd.f32 0.0, %v476
    %v478 = vpop.f32.mrf.mxu0
    %v479 = vadd.f32 0.0, %v478
    %480 = vmatmul.bf16.gmra.mxu0 %v446
    %v481 = vpop.f32.mrf.mxu0
    %v482 = vadd.f32 0.0, %v481
    %v483 = vpop.f32.mrf.mxu0
    %v484 = vadd.f32 0.0, %v483
    %485 = vdwg.mxu0
    %v486 = vadd.f32 %v363, %v458
    %v487 = vadd.f32 %v382, %v477
    %v488 = vadd.f32 %v365, %v460
    %v489 = vadd.f32 %v384, %v479
    %v490 = vadd.f32 %v368, %v463
    %v491 = vadd.f32 %v387, %v482
    %v492 = vadd.f32 %v370, %v465
    %v493 = vadd.f32 %v389, %v484
    %v494 = vld [vmem:[%s2] sm:$0xf]
    %v496 = vperm.slane %v494, 0
    %v497 = vperm.slane %v494, 2
    %v500 = vperm.slane %v496, 0
    %v501 = vperm.slane %v497, 0
    %v502 = vmul.f32 %v486, %v500
    %v503 = vmul.f32 %v487, %v501
    %v504 = vmul.f32 %v488, %v500
    %v505 = vmul.f32 %v489, %v501
    %v506 = vmul.f32 %v490, %v500
    %v507 = vmul.f32 %v491, %v501
    %v508 = vmul.f32 %v492, %v500
    %v509 = vmul.f32 %v493, %v501
    %v510 = vperm.slane %v494, 1
    %v511 = vperm.slane %v494, 3
    %v514 = vperm.slane %v510, 1
    %v515 = vperm.slane %v511, 1
    %v516 = vadd.f32 %v502, %v514
    %v517 = vadd.f32 %v503, %v515
    %v518 = vadd.f32 %v504, %v514
    %v519 = vadd.f32 %v505, %v515
    %v520 = vadd.f32 %v506, %v514
    %v521 = vadd.f32 %v507, %v515
    %v522 = vadd.f32 %v508, %v514
    %v523 = vadd.f32 %v509, %v515
    %v524 = vmax.f32 %v516, 0.0
    %v525 = vmax.f32 %v517, 0.0
    %v526 = vmax.f32 %v518, 0.0
    %v527 = vmax.f32 %v519, 0.0
    %v528 = vmax.f32 %v520, 0.0
    %v529 = vmax.f32 %v521, 0.0
    %v530 = vmax.f32 %v522, 0.0
    %v531 = vmax.f32 %v523, 0.0
    %v532 = vrot.slane %v524, 1
    %v533 = vrot.slane %v525, 1
    %v534 = vrot.slane %v526, 1
    %v535 = vrot.slane %v527, 1
    %v536 = vrot.slane %v528, 1
    %v537 = vrot.slane %v529, 1
    %v538 = vrot.slane %v530, 1
    %v539 = vrot.slane %v531, 1
    %v540 = vsel %vm184, %v536, %v538
    %v541 = vsel %vm184, %v537, %v539
    %v542 = vsel %vm184, %v534, %v536
    %v543 = vsel %vm184, %v535, %v537
    %v544 = vsel %vm184, %v532, %v534
    %v545 = vsel %vm184, %v533, %v535
    %v546 = vsel %vm184, %v538, %v532
    %v547 = vsel %vm184, %v539, %v533
    %v548 = vmax.f32 %v524, %v544
    %v549 = vmax.f32 %v525, %v545
    %v550 = vmax.f32 %v526, %v542
    %v551 = vmax.f32 %v527, %v543
    %v552 = vmax.f32 %v528, %v540
    %v553 = vmax.f32 %v529, %v541
    %v554 = vmax.f32 %v530, %v546
    %v555 = vmax.f32 %v531, %v547
    %556 = vrot.lane.b32.xlu0 %v548, 112
    %v557 = vpop.permute.xlu0 %556
    %558 = vrot.lane.b32.xlu0 %v550, 112
    %v559 = vpop.permute.xlu0 %558
    %560 = vrot.lane.b32.xlu0 %v552, 112
    %v561 = vpop.permute.xlu0 %560
    %562 = vrot.lane.b32.xlu0 %v554, 112
    %v563 = vpop.permute.xlu0 %562
    %564 = vrot.lane.b32.xlu0 %v549, 112
    %v565 = vpop.permute.xlu0 %564
    %566 = vrot.lane.b32.xlu0 %v551, 112
    %v567 = vpop.permute.xlu0 %566
    %568 = vrot.lane.b32.xlu0 %v553, 112
    %v569 = vpop.permute.xlu0 %568
    %570 = vrot.lane.b32.xlu0 %v555, 112
    %v571 = vpop.permute.xlu0 %570
    %v572 = vlaneseq
    %v573 = vand.u32 %v572, 127
    %vm574 = vcmp.lt.s32.totalorder %v573, 112
    %v575 = vsel %vm574, %v557, %v565
    %v576 = vsel %vm574, %v559, %v567
    %v577 = vsel %vm574, %v561, %v569
    %v578 = vsel %vm574, %v563, %v571
    %v579 = vsel %vm574, %v565, %v557
    %v580 = vsel %vm574, %v567, %v559
    %v581 = vsel %vm574, %v569, %v561
    %v582 = vsel %vm574, %v571, %v563
    %v583 = vmax.f32 %v548, %v575
    %v584 = vmax.f32 %v549, %v579
    %v585 = vmax.f32 %v550, %v576
    %v586 = vmax.f32 %v551, %v580
    %v587 = vmax.f32 %v552, %v577
    %v588 = vmax.f32 %v553, %v581
    %v589 = vmax.f32 %v554, %v578
    %v590 = vmax.f32 %v555, %v582
    %v591 = vld [vmem:[%s3] sm:$0xf]
    %v592 = vld [vmem:[%s3 + $0x4] sm:$0xf]
    %v593 = vpack.c.bf16 %v585, %v583
    %v594 = vpack.c.bf16 %v586, %v584
    %v595 = vpack.c.bf16 %v589, %v587
    %v596 = vpack.c.bf16 %v590, %v588
    %v599 = vunpack.c.l.b16 %v591
    %v600 = vunpack.c.l.b16 %v592
    %v601 = vpack.c.b16 %v600, %v599
    %vm602 = vcmask 261120
    %v604 = vsel %vm602, %v601, 0
    %606 = vmatpush.bf16.msra.mxu0 0
    %607 = vmatpush.bf16.msra.mxu0 0
    %608 = vmatpush.bf16.msra.mxu0 0
    %609 = vmatpush.bf16.msra.mxu0 0
    %610 = vmatpush.bf16.msra.mxu0 0
    %611 = vmatpush.bf16.msra.mxu0 0
    %612 = vmatpush.bf16.msra.mxu0 %v595
    %613 = vmatpush.bf16.msra.mxu0 %v593
    %614 = vmatmul.bf16.gmra.mxu0 %v604
    %v615 = vpop.f32.mrf.mxu0
    %v616 = vadd.f32 0.0, %v615
    %v617 = vpop.f32.mrf.mxu0
    %v618 = vadd.f32 0.0, %v617
    %619 = vdwg.mxu0
    %620 = vmatpush.bf16.msra.mxu0 0
    %621 = vmatpush.bf16.msra.mxu0 0
    %622 = vmatpush.bf16.msra.mxu0 0
    %623 = vmatpush.bf16.msra.mxu0 0
    %624 = vmatpush.bf16.msra.mxu0 0
    %625 = vmatpush.bf16.msra.mxu0 0
    %626 = vmatpush.bf16.msra.mxu0 %v596
    %627 = vmatpush.bf16.msra.mxu0 %v594
    %628 = vmatmul.bf16.gmra.mxu0 %v604
    %v629 = vpop.f32.mrf.mxu0
    %v630 = vadd.f32 0.0, %v629
    %v631 = vpop.f32.mrf.mxu0
    %v632 = vadd.f32 0.0, %v631
    %633 = vdwg.mxu0
    %v634 = vpack.c.bf16 %v618, %v616
    %v635 = vpack.c.bf16 %v632, %v630
    %v636 = vld [vmem:[#allocation6] sm:$0xf]
    %v637 = vld [vmem:[#allocation6 + $0x4] sm:$0xf]
    %v638 = vld [vmem:[#allocation6 + $0x8] sm:$0xf]
    %v639 = vld [vmem:[#allocation6 + $0xc] sm:$0xf]
    %v640 = vld [vmem:[#allocation6 + $0x10] sm:$0xf]
    %v641 = vld [vmem:[#allocation6 + $0x14] sm:$0xf]
    %v642 = vld [vmem:[#allocation6 + $0x18] sm:$0xf]
    %v643 = vld [vmem:[#allocation6 + $0x1c] sm:$0xf]
    %v644 = vld [vmem:[#allocation6 + $0x20] sm:$0xf]
    %v645 = vld [vmem:[#allocation6 + $0x24] sm:$0xf]
    %v646 = vld [vmem:[#allocation6 + $0x28] sm:$0xf]
    %v647 = vld [vmem:[#allocation6 + $0x2c] sm:$0xf]
    %v648 = vld [vmem:[#allocation6 + $0x30] sm:$0xf]
    %v649 = vld [vmem:[#allocation6 + $0x34] sm:$0xf]
    %v650 = vld [vmem:[#allocation6 + $0x38] sm:$0xf]
    %v651 = vld [vmem:[#allocation6 + $0x3c] sm:$0xf]
    %v652 = vld [vmem:[#allocation6 + $0x40] sm:$0xf]
    %v653 = vld [vmem:[#allocation6 + $0x44] sm:$0xf]
    %v654 = vld [vmem:[#allocation6 + $0x48] sm:$0xf]
    %v655 = vld [vmem:[#allocation6 + $0x4c] sm:$0xf]
    %v656 = vld [vmem:[#allocation6 + $0x50] sm:$0xf]
    %v657 = vld [vmem:[#allocation6 + $0x54] sm:$0xf]
    %v658 = vld [vmem:[#allocation6 + $0x58] sm:$0xf]
    %v659 = vld [vmem:[#allocation6 + $0x5c] sm:$0xf]
    %v660 = vld [vmem:[#allocation6 + $0x60] sm:$0xf]
    %v661 = vld [vmem:[#allocation6 + $0x64] sm:$0xf]
    %v662 = vld [vmem:[#allocation6 + $0x68] sm:$0xf]
    %v663 = vld [vmem:[#allocation6 + $0x6c] sm:$0xf]
    %v664 = vld [vmem:[#allocation6 + $0x70] sm:$0xf]
    %v665 = vld [vmem:[#allocation6 + $0x74] sm:$0xf]
    %v666 = vld [vmem:[#allocation6 + $0x78] sm:$0xf]
    %v667 = vld [vmem:[#allocation6 + $0x7c] sm:$0xf]
    %v700 = vunpack.c.l.b16 %v636
    %v701 = vunpack.c.l.b16 %v637
    %v702 = vunpack.c.l.b16 %v638
    %v703 = vunpack.c.l.b16 %v639
    %v704 = vunpack.c.l.b16 %v640
    %v705 = vunpack.c.l.b16 %v641
    %v706 = vunpack.c.l.b16 %v642
    %v707 = vunpack.c.l.b16 %v643
    %v708 = vunpack.c.l.b16 %v644
    %v709 = vunpack.c.l.b16 %v645
    %v710 = vunpack.c.l.b16 %v646
    %v711 = vunpack.c.l.b16 %v647
    %v712 = vunpack.c.l.b16 %v648
    %v713 = vunpack.c.l.b16 %v649
    %v714 = vunpack.c.l.b16 %v650
    %v715 = vunpack.c.l.b16 %v651
    %v716 = vunpack.c.l.b16 %v652
    %v717 = vunpack.c.l.b16 %v653
    %v718 = vunpack.c.l.b16 %v654
    %v719 = vunpack.c.l.b16 %v655
    %v720 = vunpack.c.l.b16 %v656
    %v721 = vunpack.c.l.b16 %v657
    %v722 = vunpack.c.l.b16 %v658
    %v723 = vunpack.c.l.b16 %v659
    %v724 = vunpack.c.l.b16 %v660
    %v725 = vunpack.c.l.b16 %v661
    %v726 = vunpack.c.l.b16 %v662
    %v727 = vunpack.c.l.b16 %v663
    %v728 = vunpack.c.l.b16 %v664
    %v729 = vunpack.c.l.b16 %v665
    %v730 = vunpack.c.l.b16 %v666
    %v731 = vunpack.c.l.b16 %v667
    %v732 = vpack.c.b16 %v701, %v700
    %v733 = vpack.c.b16 %v703, %v702
    %v734 = vpack.c.b16 %v705, %v704
    %v735 = vpack.c.b16 %v707, %v706
    %v736 = vpack.c.b16 %v709, %v708
    %v737 = vpack.c.b16 %v711, %v710
    %v738 = vpack.c.b16 %v713, %v712
    %v739 = vpack.c.b16 %v715, %v714
    %v740 = vpack.c.b16 %v717, %v716
    %v741 = vpack.c.b16 %v719, %v718
    %v742 = vpack.c.b16 %v721, %v720
    %v743 = vpack.c.b16 %v723, %v722
    %v744 = vpack.c.b16 %v725, %v724
    %v745 = vpack.c.b16 %v727, %v726
    %v746 = vpack.c.b16 %v729, %v728
    %v747 = vpack.c.b16 %v731, %v730
    %764 = vmatpush.bf16.msra.mxu0 %v739
    %765 = vmatpush.bf16.msra.mxu0 %v738
    %766 = vmatpush.bf16.msra.mxu0 %v737
    %767 = vmatpush.bf16.msra.mxu0 %v736
    %768 = vmatpush.bf16.msra.mxu0 %v735
    %769 = vmatpush.bf16.msra.mxu0 %v734
    %770 = vmatpush.bf16.msra.mxu0 %v733
    %771 = vmatpush.bf16.msra.mxu0 %v732
    %772 = vmatmul.bf16.gmra.mxu0 %v634
    %v773 = vpop.f32.mrf.mxu0
    %v774 = vadd.f32 0.0, %v773
    %v775 = vpop.f32.mrf.mxu0
    %v776 = vadd.f32 0.0, %v775
    %777 = vdwg.mxu0
    %778 = vmatpush.bf16.msra.mxu0 %v747
    %779 = vmatpush.bf16.msra.mxu0 %v746
    %780 = vmatpush.bf16.msra.mxu0 %v745
    %781 = vmatpush.bf16.msra.mxu0 %v744
    %782 = vmatpush.bf16.msra.mxu0 %v743
    %783 = vmatpush.bf16.msra.mxu0 %v742
    %784 = vmatpush.bf16.msra.mxu0 %v741
    %785 = vmatpush.bf16.msra.mxu0 %v740
    %786 = vmatmul.bf16.gmra.mxu0 %v635
    %v787 = vpop.f32.mrf.mxu0
    %v788 = vadd.f32 %v774, %v787
    %v789 = vpop.f32.mrf.mxu0
    %v790 = vadd.f32 %v776, %v789
    %791 = vdwg.mxu0
    %v792 = vand.u32 %v143, 7
    %v793 = vand.u32 %v144, 7
    %vm794 = vcmp.gt.s32.totalorder %v792, 0
    %vm795 = vcmp.gt.s32.totalorder %v793, 0
    %v796 = vrot.slane %v788, 7
    %v797 = vrot.slane %v790, 7
    %v798 = vsel %vm159, %v796, %v797
    %v799 = vsel %vm159, %v797, %v796
    %v800 = vsel %vm794, 1, 0
    %v801 = vsel %vm795, 1, 0
    %vm802 = vcmp.eq.s32.totalorder %v800, 1
    %vm803 = vcmp.eq.s32.totalorder %v801, 1
    %v804 = vsel %vm802, %v799, 0.0
    %v805 = vsel %vm803, %v798, 0.0
    %vm806 = vcmp.lt.s32.totalorder %v792, 7
    %vm807 = vcmp.lt.s32.totalorder %v793, 7
    %v808 = vrot.slane %v788, 1
    %v809 = vrot.slane %v790, 1
    %v810 = vsel %vm184, %v808, %v809
    %v811 = vsel %vm184, %v809, %v808
    %v812 = vsel %vm806, 1, 0
    %v813 = vsel %vm807, 1, 0
    %vm814 = vcmp.eq.s32.totalorder %v812, 1
    %vm815 = vcmp.eq.s32.totalorder %v813, 1
    %v816 = vsel %vm814, %v810, 0.0
    %v817 = vsel %vm815, %v811, 0.0
    %v818 = vpack.c.bf16 %v805, %v804
    %v819 = vld [vmem:[%s5] sm:$0xff]
    %v820 = vld [vmem:[%s5 + $0x8] sm:$0xff]
    %v821 = vld [vmem:[%s5 + $0x10] sm:$0xff]
    %v822 = vld [vmem:[%s5 + $0x18] sm:$0xff]
    %v823 = vld [vmem:[%s5 + $0x20] sm:$0xff]
    %v824 = vld [vmem:[%s5 + $0x28] sm:$0xff]
    %v825 = vld [vmem:[%s5 + $0x30] sm:$0xff]
    %v826 = vld [vmem:[%s5 + $0x38] sm:$0xff]
    %v827 = vld [vmem:[%s5 + $0x40] sm:$0xff]
    %v828 = vld [vmem:[%s5 + $0x48] sm:$0xff]
    %v829 = vld [vmem:[%s5 + $0x50] sm:$0xff]
    %v830 = vld [vmem:[%s5 + $0x58] sm:$0xff]
    %v831 = vld [vmem:[%s5 + $0x60] sm:$0xff]
    %v832 = vld [vmem:[%s5 + $0x68] sm:$0xff]
    %v833 = vld [vmem:[%s5 + $0x70] sm:$0xff]
    %v834 = vld [vmem:[%s5 + $0x78] sm:$0xff]
    %v835 = vpack.c.bf16 %v790, %v788
    %s836 = scalar_lea.vmem %s5, 128
    %v837 = vld [vmem:[%s836] sm:$0xff]
    %v838 = vld [vmem:[%s836 + $0x8] sm:$0xff]
    %v839 = vld [vmem:[%s836 + $0x10] sm:$0xff]
    %v840 = vld [vmem:[%s836 + $0x18] sm:$0xff]
    %v841 = vld [vmem:[%s836 + $0x20] sm:$0xff]
    %v842 = vld [vmem:[%s836 + $0x28] sm:$0xff]
    %v843 = vld [vmem:[%s836 + $0x30] sm:$0xff]
    %v844 = vld [vmem:[%s836 + $0x38] sm:$0xff]
    %v845 = vld [vmem:[%s836 + $0x40] sm:$0xff]
    %v846 = vld [vmem:[%s836 + $0x48] sm:$0xff]
    %v847 = vld [vmem:[%s836 + $0x50] sm:$0xff]
    %v848 = vld [vmem:[%s836 + $0x58] sm:$0xff]
    %v849 = vld [vmem:[%s836 + $0x60] sm:$0xff]
    %v850 = vld [vmem:[%s836 + $0x68] sm:$0xff]
    %v851 = vld [vmem:[%s836 + $0x70] sm:$0xff]
    %v852 = vld [vmem:[%s836 + $0x78] sm:$0xff]
    %v869 = vunpack.c.l.b16 %v837
    %v870 = vunpack.c.h.b16 %v837
    %v871 = vunpack.c.l.b16 %v838
    %v872 = vunpack.c.h.b16 %v838
    %v873 = vunpack.c.l.b16 %v839
    %v874 = vunpack.c.h.b16 %v839
    %v875 = vunpack.c.l.b16 %v840
    %v876 = vunpack.c.h.b16 %v840
    %v877 = vunpack.c.l.b16 %v841
    %v878 = vunpack.c.h.b16 %v841
    %v879 = vunpack.c.l.b16 %v842
    %v880 = vunpack.c.h.b16 %v842
    %v881 = vunpack.c.l.b16 %v843
    %v882 = vunpack.c.h.b16 %v843
    %v883 = vunpack.c.l.b16 %v844
    %v884 = vunpack.c.h.b16 %v844
    %v885 = vunpack.c.l.b16 %v845
    %v886 = vunpack.c.h.b16 %v845
    %v887 = vunpack.c.l.b16 %v846
    %v888 = vunpack.c.h.b16 %v846
    %v889 = vunpack.c.l.b16 %v847
    %v890 = vunpack.c.h.b16 %v847
    %v891 = vunpack.c.l.b16 %v848
    %v892 = vunpack.c.h.b16 %v848
    %v893 = vunpack.c.l.b16 %v849
    %v894 = vunpack.c.h.b16 %v849
    %v895 = vunpack.c.l.b16 %v850
    %v896 = vunpack.c.h.b16 %v850
    %v897 = vunpack.c.l.b16 %v851
    %v898 = vunpack.c.h.b16 %v851
    %v899 = vunpack.c.l.b16 %v852
    %v900 = vunpack.c.h.b16 %v852
    %v901 = vpack.c.b16 %v871, %v869
    %v902 = vpack.c.b16 %v872, %v870
    %v903 = vpack.c.b16 %v875, %v873
    %v904 = vpack.c.b16 %v876, %v874
    %v905 = vpack.c.b16 %v879, %v877
    %v906 = vpack.c.b16 %v880, %v878
    %v907 = vpack.c.b16 %v883, %v881
    %v908 = vpack.c.b16 %v884, %v882
    %v909 = vpack.c.b16 %v887, %v885
    %v910 = vpack.c.b16 %v888, %v886
    %v911 = vpack.c.b16 %v891, %v889
    %v912 = vpack.c.b16 %v892, %v890
    %v913 = vpack.c.b16 %v895, %v893
    %v914 = vpack.c.b16 %v896, %v894
    %v915 = vpack.c.b16 %v899, %v897
    %v916 = vpack.c.b16 %v900, %v898
    %933 = vmatpush.bf16.msra.mxu0 %v915
    %934 = vmatpush.bf16.msra.mxu0 %v913
    %935 = vmatpush.bf16.msra.mxu0 %v911
    %936 = vmatpush.bf16.msra.mxu0 %v909
    %937 = vmatpush.bf16.msra.mxu0 %v907
    %938 = vmatpush.bf16.msra.mxu0 %v905
    %939 = vmatpush.bf16.msra.mxu0 %v903
    %940 = vmatpush.bf16.msra.mxu0 %v901
    %941 = vmatmul.bf16.gmra.mxu0 %v835
    %v942 = vpop.f32.mrf.mxu0
    %v943 = vadd.f32 0.0, %v942
    %v944 = vpop.f32.mrf.mxu0
    %v945 = vadd.f32 0.0, %v944
    %946 = vdwg.mxu0
    %947 = vmatpush.bf16.msra.mxu0 %v916
    %948 = vmatpush.bf16.msra.mxu0 %v914
    %949 = vmatpush.bf16.msra.mxu0 %v912
    %950 = vmatpush.bf16.msra.mxu0 %v910
    %951 = vmatpush.bf16.msra.mxu0 %v908
    %952 = vmatpush.bf16.msra.mxu0 %v906
    %953 = vmatpush.bf16.msra.mxu0 %v904
    %954 = vmatpush.bf16.msra.mxu0 %v902
    %955 = vmatmul.bf16.gmra.mxu0 %v835
    %v956 = vpop.f32.mrf.mxu0
    %v957 = vadd.f32 0.0, %v956
    %v958 = vpop.f32.mrf.mxu0
    %v959 = vadd.f32 0.0, %v958
    %960 = vdwg.mxu0
    %v977 = vunpack.c.l.b16 %v819
    %v978 = vunpack.c.h.b16 %v819
    %v979 = vunpack.c.l.b16 %v820
    %v980 = vunpack.c.h.b16 %v820
    %v981 = vunpack.c.l.b16 %v821
    %v982 = vunpack.c.h.b16 %v821
    %v983 = vunpack.c.l.b16 %v822
    %v984 = vunpack.c.h.b16 %v822
    %v985 = vunpack.c.l.b16 %v823
    %v986 = vunpack.c.h.b16 %v823
    %v987 = vunpack.c.l.b16 %v824
    %v988 = vunpack.c.h.b16 %v824
    %v989 = vunpack.c.l.b16 %v825
    %v990 = vunpack.c.h.b16 %v825
    %v991 = vunpack.c.l.b16 %v826
    %v992 = vunpack.c.h.b16 %v826
    %v993 = vunpack.c.l.b16 %v827
    %v994 = vunpack.c.h.b16 %v827
    %v995 = vunpack.c.l.b16 %v828
    %v996 = vunpack.c.h.b16 %v828
    %v997 = vunpack.c.l.b16 %v829
    %v998 = vunpack.c.h.b16 %v829
    %v999 = vunpack.c.l.b16 %v830
    %v1000 = vunpack.c.h.b16 %v830
    %v1001 = vunpack.c.l.b16 %v831
    %v1002 = vunpack.c.h.b16 %v831
    %v1003 = vunpack.c.l.b16 %v832
    %v1004 = vunpack.c.h.b16 %v832
    %v1005 = vunpack.c.l.b16 %v833
    %v1006 = vunpack.c.h.b16 %v833
    %v1007 = vunpack.c.l.b16 %v834
    %v1008 = vunpack.c.h.b16 %v834
    %v1009 = vpack.c.b16 %v979, %v977
    %v1010 = vpack.c.b16 %v980, %v978
    %v1011 = vpack.c.b16 %v983, %v981
    %v1012 = vpack.c.b16 %v984, %v982
    %v1013 = vpack.c.b16 %v987, %v985
    %v1014 = vpack.c.b16 %v988, %v986
    %v1015 = vpack.c.b16 %v991, %v989
    %v1016 = vpack.c.b16 %v992, %v990
    %v1017 = vpack.c.b16 %v995, %v993
    %v1018 = vpack.c.b16 %v996, %v994
    %v1019 = vpack.c.b16 %v999, %v997
    %v1020 = vpack.c.b16 %v1000, %v998
    %v1021 = vpack.c.b16 %v1003, %v1001
    %v1022 = vpack.c.b16 %v1004, %v1002
    %v1023 = vpack.c.b16 %v1007, %v1005
    %v1024 = vpack.c.b16 %v1008, %v1006
    %1041 = vmatpush.bf16.msra.mxu0 %v1023
    %1042 = vmatpush.bf16.msra.mxu0 %v1021
    %1043 = vmatpush.bf16.msra.mxu0 %v1019
    %1044 = vmatpush.bf16.msra.mxu0 %v1017
    %1045 = vmatpush.bf16.msra.mxu0 %v1015
    %1046 = vmatpush.bf16.msra.mxu0 %v1013
    %1047 = vmatpush.bf16.msra.mxu0 %v1011
    %1048 = vmatpush.bf16.msra.mxu0 %v1009
    %1049 = vmatmul.bf16.gmra.mxu0 %v818
    %v1050 = vpop.f32.mrf.mxu0
    %v1051 = vadd.f32 %v943, %v1050
    %v1052 = vpop.f32.mrf.mxu0
    %v1053 = vadd.f32 %v945, %v1052
    %1054 = vdwg.mxu0
    %1055 = vmatpush.bf16.msra.mxu0 %v1024
    %1056 = vmatpush.bf16.msra.mxu0 %v1022
    %1057 = vmatpush.bf16.msra.mxu0 %v1020
    %1058 = vmatpush.bf16.msra.mxu0 %v1018
    %1059 = vmatpush.bf16.msra.mxu0 %v1016
    %1060 = vmatpush.bf16.msra.mxu0 %v1014
    %1061 = vmatpush.bf16.msra.mxu0 %v1012
    %1062 = vmatpush.bf16.msra.mxu0 %v1010
    %1063 = vmatmul.bf16.gmra.mxu0 %v818
    %v1064 = vpop.f32.mrf.mxu0
    %v1065 = vadd.f32 %v957, %v1064
    %v1066 = vpop.f32.mrf.mxu0
    %v1067 = vadd.f32 %v959, %v1066
    %1068 = vdwg.mxu0
    %v1069 = vpack.c.bf16 %v817, %v816
    %s1070 = scalar_lea.vmem %s5, 256
    %v1071 = vld [vmem:[%s1070] sm:$0xff]
    %v1072 = vld [vmem:[%s1070 + $0x8] sm:$0xff]
    %v1073 = vld [vmem:[%s1070 + $0x10] sm:$0xff]
    %v1074 = vld [vmem:[%s1070 + $0x18] sm:$0xff]
    %v1075 = vld [vmem:[%s1070 + $0x20] sm:$0xff]
    %v1076 = vld [vmem:[%s1070 + $0x28] sm:$0xff]
    %v1077 = vld [vmem:[%s1070 + $0x30] sm:$0xff]
    %v1078 = vld [vmem:[%s1070 + $0x38] sm:$0xff]
    %v1079 = vld [vmem:[%s1070 + $0x40] sm:$0xff]
    %v1080 = vld [vmem:[%s1070 + $0x48] sm:$0xff]
    %v1081 = vld [vmem:[%s1070 + $0x50] sm:$0xff]
    %v1082 = vld [vmem:[%s1070 + $0x58] sm:$0xff]
    %v1083 = vld [vmem:[%s1070 + $0x60] sm:$0xff]
    %v1084 = vld [vmem:[%s1070 + $0x68] sm:$0xff]
    %v1085 = vld [vmem:[%s1070 + $0x70] sm:$0xff]
    %v1086 = vld [vmem:[%s1070 + $0x78] sm:$0xff]
    %v1103 = vunpack.c.l.b16 %v1071
    %v1104 = vunpack.c.h.b16 %v1071
    %v1105 = vunpack.c.l.b16 %v1072
    %v1106 = vunpack.c.h.b16 %v1072
    %v1107 = vunpack.c.l.b16 %v1073
    %v1108 = vunpack.c.h.b16 %v1073
    %v1109 = vunpack.c.l.b16 %v1074
    %v1110 = vunpack.c.h.b16 %v1074
    %v1111 = vunpack.c.l.b16 %v1075
    %v1112 = vunpack.c.h.b16 %v1075
    %v1113 = vunpack.c.l.b16 %v1076
    %v1114 = vunpack.c.h.b16 %v1076
    %v1115 = vunpack.c.l.b16 %v1077
    %v1116 = vunpack.c.h.b16 %v1077
    %v1117 = vunpack.c.l.b16 %v1078
    %v1118 = vunpack.c.h.b16 %v1078
    %v1119 = vunpack.c.l.b16 %v1079
    %v1120 = vunpack.c.h.b16 %v1079
    %v1121 = vunpack.c.l.b16 %v1080
    %v1122 = vunpack.c.h.b16 %v1080
    %v1123 = vunpack.c.l.b16 %v1081
    %v1124 = vunpack.c.h.b16 %v1081
    %v1125 = vunpack.c.l.b16 %v1082
    %v1126 = vunpack.c.h.b16 %v1082
    %v1127 = vunpack.c.l.b16 %v1083
    %v1128 = vunpack.c.h.b16 %v1083
    %v1129 = vunpack.c.l.b16 %v1084
    %v1130 = vunpack.c.h.b16 %v1084
    %v1131 = vunpack.c.l.b16 %v1085
    %v1132 = vunpack.c.h.b16 %v1085
    %v1133 = vunpack.c.l.b16 %v1086
    %v1134 = vunpack.c.h.b16 %v1086
    %v1135 = vpack.c.b16 %v1105, %v1103
    %v1136 = vpack.c.b16 %v1106, %v1104
    %v1137 = vpack.c.b16 %v1109, %v1107
    %v1138 = vpack.c.b16 %v1110, %v1108
    %v1139 = vpack.c.b16 %v1113, %v1111
    %v1140 = vpack.c.b16 %v1114, %v1112
    %v1141 = vpack.c.b16 %v1117, %v1115
    %v1142 = vpack.c.b16 %v1118, %v1116
    %v1143 = vpack.c.b16 %v1121, %v1119
    %v1144 = vpack.c.b16 %v1122, %v1120
    %v1145 = vpack.c.b16 %v1125, %v1123
    %v1146 = vpack.c.b16 %v1126, %v1124
    %v1147 = vpack.c.b16 %v1129, %v1127
    %v1148 = vpack.c.b16 %v1130, %v1128
    %v1149 = vpack.c.b16 %v1133, %v1131
    %v1150 = vpack.c.b16 %v1134, %v1132
    %1167 = vmatpush.bf16.msra.mxu0 %v1149
    %1168 = vmatpush.bf16.msra.mxu0 %v1147
    %1169 = vmatpush.bf16.msra.mxu0 %v1145
    %1170 = vmatpush.bf16.msra.mxu0 %v1143
    %1171 = vmatpush.bf16.msra.mxu0 %v1141
    %1172 = vmatpush.bf16.msra.mxu0 %v1139
    %1173 = vmatpush.bf16.msra.mxu0 %v1137
    %1174 = vmatpush.bf16.msra.mxu0 %v1135
    %1175 = vmatmul.bf16.gmra.mxu0 %v1069
    %v1176 = vpop.f32.mrf.mxu0
    %v1177 = vadd.f32 0.0, %v1176
    %v1178 = vpop.f32.mrf.mxu0
    %v1179 = vadd.f32 0.0, %v1178
    %1180 = vdwg.mxu0
    %1181 = vmatpush.bf16.msra.mxu0 %v1150
    %1182 = vmatpush.bf16.msra.mxu0 %v1148
    %1183 = vmatpush.bf16.msra.mxu0 %v1146
    %1184 = vmatpush.bf16.msra.mxu0 %v1144
    %1185 = vmatpush.bf16.msra.mxu0 %v1142
    %1186 = vmatpush.bf16.msra.mxu0 %v1140
    %1187 = vmatpush.bf16.msra.mxu0 %v1138
    %1188 = vmatpush.bf16.msra.mxu0 %v1136
    %1189 = vmatmul.bf16.gmra.mxu0 %v1069
    %v1190 = vpop.f32.mrf.mxu0
    %v1191 = vadd.f32 0.0, %v1190
    %v1192 = vpop.f32.mrf.mxu0
    %v1193 = vadd.f32 0.0, %v1192
    %1194 = vdwg.mxu0
    %v1195 = vadd.f32 %v1051, %v1177
    %v1196 = vadd.f32 %v1065, %v1191
    %v1197 = vadd.f32 %v1053, %v1179
    %v1198 = vadd.f32 %v1067, %v1193
    %v1199 = vld [vmem:[%s6] sm:$0xf]
    %v1201 = vperm.slane %v1199, 0
    %v1202 = vperm.slane %v1199, 2
    %v1205 = vperm.slane %v1201, 0
    %v1206 = vperm.slane %v1202, 0
    %v1207 = vmul.f32 %v1195, %v1205
    %v1208 = vmul.f32 %v1196, %v1206
    %v1209 = vmul.f32 %v1197, %v1205
    %v1210 = vmul.f32 %v1198, %v1206
    %v1211 = vperm.slane %v1199, 1
    %v1212 = vperm.slane %v1199, 3
    %v1215 = vperm.slane %v1211, 1
    %v1216 = vperm.slane %v1212, 1
    %v1217 = vadd.f32 %v1207, %v1215
    %v1218 = vadd.f32 %v1208, %v1216
    %v1219 = vadd.f32 %v1209, %v1215
    %v1220 = vadd.f32 %v1210, %v1216
    %v1221 = vmax.f32 %v1217, 0.0
    %v1222 = vmax.f32 %v1218, 0.0
    %v1223 = vmax.f32 %v1219, 0.0
    %v1224 = vmax.f32 %v1220, 0.0
    %v1225 = vrot.slane %v1221, 1
    %v1226 = vrot.slane %v1222, 1
    %v1227 = vrot.slane %v1223, 1
    %v1228 = vrot.slane %v1224, 1
    %v1229 = vsel %vm184, %v1225, %v1227
    %v1230 = vsel %vm184, %v1226, %v1228
    %v1231 = vsel %vm184, %v1227, %v1225
    %v1232 = vsel %vm184, %v1228, %v1226
    %v1233 = vmax.f32 %v1221, %v1229
    %v1234 = vmax.f32 %v1222, %v1230
    %v1235 = vmax.f32 %v1223, %v1231
    %v1236 = vmax.f32 %v1224, %v1232
    %1237 = vrot.lane.b32.xlu0 %v1233, 96
    %v1238 = vpop.permute.xlu0 %1237
    %1239 = vrot.lane.b32.xlu0 %v1235, 96
    %v1240 = vpop.permute.xlu0 %1239
    %1241 = vrot.lane.b32.xlu0 %v1234, 96
    %v1242 = vpop.permute.xlu0 %1241
    %1243 = vrot.lane.b32.xlu0 %v1236, 96
    %v1244 = vpop.permute.xlu0 %1243
    %vm1245 = vcmp.lt.s32.totalorder %v573, 96
    %v1246 = vsel %vm1245, %v1238, %v1242
    %v1247 = vsel %vm1245, %v1240, %v1244
    %v1248 = vsel %vm1245, %v1242, %v1238
    %v1249 = vsel %vm1245, %v1244, %v1240
    %v1250 = vmax.f32 %v1233, %v1246
    %v1251 = vmax.f32 %v1234, %v1248
    %v1252 = vmax.f32 %v1235, %v1247
    %v1253 = vmax.f32 %v1236, %v1249
    %v1254 = vld [vmem:[%s7] sm:$0xf]
    %v1255 = vld [vmem:[%s7 + $0x4] sm:$0xf]
    %v1256 = vld [vmem:[%s7 + $0x8] sm:$0xf]
    %v1257 = vld [vmem:[%s7 + $0xc] sm:$0xf]
    %v1258 = vpack.c.bf16 %v1252, %v1250
    %v1259 = vpack.c.bf16 %v1253, %v1251
    %v1264 = vunpack.c.l.b16 %v1254
    %v1265 = vunpack.c.l.b16 %v1255
    %v1266 = vunpack.c.l.b16 %v1256
    %v1267 = vunpack.c.l.b16 %v1257
    %v1268 = vpack.c.b16 %v1265, %v1264
    %v1269 = vpack.c.b16 %v1267, %v1266
    %vm1270 = vcmask 130048
    %v1272 = vsel %vm1270, %v1268, 0
    %v1275 = vsel %vm1270, %v1269, 0
    %1277 = vmatpush.bf16.msra.mxu0 0
    %1278 = vmatpush.bf16.msra.mxu0 0
    %1279 = vmatpush.bf16.msra.mxu0 0
    %1280 = vmatpush.bf16.msra.mxu0 0
    %1281 = vmatpush.bf16.msra.mxu0 0
    %1282 = vmatpush.bf16.msra.mxu0 0
    %1283 = vmatpush.bf16.msra.mxu0 0
    %1284 = vmatpush.bf16.msra.mxu0 %v1258
    %1285 = vmatmul.bf16.gmra.mxu0 %v1272
    %v1286 = vpop.f32.mrf.mxu0
    %v1287 = vadd.f32 0.0, %v1286
    %v1288 = vpop.f32.mrf.mxu0
    %v1289 = vadd.f32 0.0, %v1288
    %1290 = vmatmul.bf16.gmra.mxu0 %v1275
    %v1291 = vpop.f32.mrf.mxu0
    %v1292 = vadd.f32 0.0, %v1291
    %v1293 = vpop.f32.mrf.mxu0
    %v1294 = vadd.f32 0.0, %v1293
    %1295 = vdwg.mxu0
    %1296 = vmatpush.bf16.msra.mxu0 0
    %1297 = vmatpush.bf16.msra.mxu0 0
    %1298 = vmatpush.bf16.msra.mxu0 0
    %1299 = vmatpush.bf16.msra.mxu0 0
    %1300 = vmatpush.bf16.msra.mxu0 0
    %1301 = vmatpush.bf16.msra.mxu0 0
    %1302 = vmatpush.bf16.msra.mxu0 0
    %1303 = vmatpush.bf16.msra.mxu0 %v1259
    %1304 = vmatmul.bf16.gmra.mxu0 %v1272
    %v1305 = vpop.f32.mrf.mxu0
    %v1306 = vadd.f32 0.0, %v1305
    %v1307 = vpop.f32.mrf.mxu0
    %v1308 = vadd.f32 0.0, %v1307
    %1309 = vmatmul.bf16.gmra.mxu0 %v1275
    %v1310 = vpop.f32.mrf.mxu0
    %v1311 = vadd.f32 0.0, %v1310
    %v1312 = vpop.f32.mrf.mxu0
    %v1313 = vadd.f32 0.0, %v1312
    %1314 = vdwg.mxu0
    %v1315 = vpack.c.bf16 %v1289, %v1287
    %v1316 = vpack.c.bf16 %v1308, %v1306
    %v1317 = vpack.c.bf16 %v1294, %v1292
    %v1318 = vpack.c.bf16 %v1313, %v1311
    %v1319 = vld [vmem:[#allocation8] sm:$0xf]
    %v1320 = vld [vmem:[#allocation8 + $0x4] sm:$0xf]
    %v1321 = vld [vmem:[#allocation8 + $0x8] sm:$0xf]
    %v1322 = vld [vmem:[#allocation8 + $0xc] sm:$0xf]
    %v1323 = vld [vmem:[#allocation8 + $0x10] sm:$0xf]
    %v1324 = vld [vmem:[#allocation8 + $0x14] sm:$0xf]
    %v1325 = vld [vmem:[#allocation8 + $0x18] sm:$0xf]
    %v1326 = vld [vmem:[#allocation8 + $0x1c] sm:$0xf]
    %v1327 = vld [vmem:[#allocation8 + $0x20] sm:$0xf]
    %v1328 = vld [vmem:[#allocation8 + $0x24] sm:$0xf]
    %v1329 = vld [vmem:[#allocation8 + $0x28] sm:$0xf]
    %v1330 = vld [vmem:[#allocation8 + $0x2c] sm:$0xf]
    %v1331 = vld [vmem:[#allocation8 + $0x30] sm:$0xf]
    %v1332 = vld [vmem:[#allocation8 + $0x34] sm:$0xf]
    %v1333 = vld [vmem:[#allocation8 + $0x38] sm:$0xf]
    %v1334 = vld [vmem:[#allocation8 + $0x3c] sm:$0xf]
    %v1335 = vld [vmem:[#allocation8 + $0x40] sm:$0xf]
    %v1336 = vld [vmem:[#allocation8 + $0x44] sm:$0xf]
    %v1337 = vld [vmem:[#allocation8 + $0x48] sm:$0xf]
    %v1338 = vld [vmem:[#allocation8 + $0x4c] sm:$0xf]
    %v1339 = vld [vmem:[#allocation8 + $0x50] sm:$0xf]
    %v1340 = vld [vmem:[#allocation8 + $0x54] sm:$0xf]
    %v1341 = vld [vmem:[#allocation8 + $0x58] sm:$0xf]
    %v1342 = vld [vmem:[#allocation8 + $0x5c] sm:$0xf]
    %v1343 = vld [vmem:[#allocation8 + $0x60] sm:$0xf]
    %v1344 = vld [vmem:[#allocation8 + $0x64] sm:$0xf]
    %v1345 = vld [vmem:[#allocation8 + $0x68] sm:$0xf]
    %v1346 = vld [vmem:[#allocation8 + $0x6c] sm:$0xf]
    %v1347 = vld [vmem:[#allocation8 + $0x70] sm:$0xf]
    %v1348 = vld [vmem:[#allocation8 + $0x74] sm:$0xf]
    %v1349 = vld [vmem:[#allocation8 + $0x78] sm:$0xf]
    %v1350 = vld [vmem:[#allocation8 + $0x7c] sm:$0xf]
    %v1383 = vunpack.c.l.b16 %v1319
    %v1384 = vunpack.c.l.b16 %v1320
    %v1385 = vunpack.c.l.b16 %v1321
    %v1386 = vunpack.c.l.b16 %v1322
    %v1387 = vunpack.c.l.b16 %v1323
    %v1388 = vunpack.c.l.b16 %v1324
    %v1389 = vunpack.c.l.b16 %v1325
    %v1390 = vunpack.c.l.b16 %v1326
    %v1391 = vunpack.c.l.b16 %v1327
    %v1392 = vunpack.c.l.b16 %v1328
    %v1393 = vunpack.c.l.b16 %v1329
    %v1394 = vunpack.c.l.b16 %v1330
    %v1395 = vunpack.c.l.b16 %v1331
    %v1396 = vunpack.c.l.b16 %v1332
    %v1397 = vunpack.c.l.b16 %v1333
    %v1398 = vunpack.c.l.b16 %v1334
    %v1399 = vunpack.c.l.b16 %v1335
    %v1400 = vunpack.c.l.b16 %v1336
    %v1401 = vunpack.c.l.b16 %v1337
    %v1402 = vunpack.c.l.b16 %v1338
    %v1403 = vunpack.c.l.b16 %v1339
    %v1404 = vunpack.c.l.b16 %v1340
    %v1405 = vunpack.c.l.b16 %v1341
    %v1406 = vunpack.c.l.b16 %v1342
    %v1407 = vunpack.c.l.b16 %v1343
    %v1408 = vunpack.c.l.b16 %v1344
    %v1409 = vunpack.c.l.b16 %v1345
    %v1410 = vunpack.c.l.b16 %v1346
    %v1411 = vunpack.c.l.b16 %v1347
    %v1412 = vunpack.c.l.b16 %v1348
    %v1413 = vunpack.c.l.b16 %v1349
    %v1414 = vunpack.c.l.b16 %v1350
    %v1415 = vpack.c.b16 %v1384, %v1383
    %v1416 = vpack.c.b16 %v1386, %v1385
    %v1417 = vpack.c.b16 %v1388, %v1387
    %v1418 = vpack.c.b16 %v1390, %v1389
    %v1419 = vpack.c.b16 %v1392, %v1391
    %v1420 = vpack.c.b16 %v1394, %v1393
    %v1421 = vpack.c.b16 %v1396, %v1395
    %v1422 = vpack.c.b16 %v1398, %v1397
    %v1423 = vpack.c.b16 %v1400, %v1399
    %v1424 = vpack.c.b16 %v1402, %v1401
    %v1425 = vpack.c.b16 %v1404, %v1403
    %v1426 = vpack.c.b16 %v1406, %v1405
    %v1427 = vpack.c.b16 %v1408, %v1407
    %v1428 = vpack.c.b16 %v1410, %v1409
    %v1429 = vpack.c.b16 %v1412, %v1411
    %v1430 = vpack.c.b16 %v1414, %v1413
    %1447 = vmatpush.bf16.msra.mxu0 %v1422
    %1448 = vmatpush.bf16.msra.mxu0 %v1421
    %1449 = vmatpush.bf16.msra.mxu0 %v1420
    %1450 = vmatpush.bf16.msra.mxu0 %v1419
    %1451 = vmatpush.bf16.msra.mxu0 %v1418
    %1452 = vmatpush.bf16.msra.mxu0 %v1417
    %1453 = vmatpush.bf16.msra.mxu0 %v1416
    %1454 = vmatpush.bf16.msra.mxu0 %v1415
    %1455 = vmatmul.bf16.gmra.mxu0 %v1315
    %v1456 = vpop.f32.mrf.mxu0
    %v1457 = vadd.f32 0.0, %v1456
    %v1458 = vpop.f32.mrf.mxu0
    %v1459 = vadd.f32 0.0, %v1458
    %1460 = vmatmul.bf16.gmra.mxu0 %v1317
    %v1461 = vpop.f32.mrf.mxu0
    %v1462 = vadd.f32 0.0, %v1461
    %v1463 = vpop.f32.mrf.mxu0
    %v1464 = vadd.f32 0.0, %v1463
    %1465 = vdwg.mxu0
    %1466 = vmatpush.bf16.msra.mxu0 %v1430
    %1467 = vmatpush.bf16.msra.mxu0 %v1429
    %1468 = vmatpush.bf16.msra.mxu0 %v1428
    %1469 = vmatpush.bf16.msra.mxu0 %v1427
    %1470 = vmatpush.bf16.msra.mxu0 %v1426
    %1471 = vmatpush.bf16.msra.mxu0 %v1425
    %1472 = vmatpush.bf16.msra.mxu0 %v1424
    %1473 = vmatpush.bf16.msra.mxu0 %v1423
    %1474 = vmatmul.bf16.gmra.mxu0 %v1316
    %v1475 = vpop.f32.mrf.mxu0
    %v1476 = vadd.f32 %v1457, %v1475
    %v1477 = vpop.f32.mrf.mxu0
    %v1478 = vadd.f32 %v1459, %v1477
    %1479 = vmatmul.bf16.gmra.mxu0 %v1318
    %v1480 = vpop.f32.mrf.mxu0
    %v1481 = vadd.f32 %v1462, %v1480
    %v1482 = vpop.f32.mrf.mxu0
    %v1483 = vadd.f32 %v1464, %v1482
    %1484 = vdwg.mxu0
    %v1485 = vpack.c.bf16 %v1476, %v1476
    %v1486 = vpack.c.bf16 %v1478, %v1478
    %v1487 = vpack.c.bf16 %v1481, %v1481
    %v1488 = vpack.c.bf16 %v1483, %v1483
    %v1489 = vld [vmem:[#allocation9] sm:$0xf]
    %v1490 = vld [vmem:[#allocation9 + $0x4] sm:$0xf]
    %v1491 = vld [vmem:[#allocation9 + $0x8] sm:$0xf]
    %v1492 = vld [vmem:[#allocation9 + $0xc] sm:$0xf]
    %v1493 = vld [vmem:[#allocation9 + $0x10] sm:$0xf]
    %v1494 = vld [vmem:[#allocation9 + $0x14] sm:$0xf]
    %v1495 = vld [vmem:[#allocation9 + $0x18] sm:$0xf]
    %v1496 = vld [vmem:[#allocation9 + $0x1c] sm:$0xf]
    %v1497 = vld [vmem:[#allocation9 + $0x20] sm:$0xf]
    %v1498 = vld [vmem:[#allocation9 + $0x24] sm:$0xf]
    %v1499 = vld [vmem:[#allocation9 + $0x28] sm:$0xf]
    %v1500 = vld [vmem:[#allocation9 + $0x2c] sm:$0xf]
    %v1501 = vld [vmem:[#allocation9 + $0x30] sm:$0xf]
    %v1502 = vld [vmem:[#allocation9 + $0x34] sm:$0xf]
    %v1503 = vld [vmem:[#allocation9 + $0x38] sm:$0xf]
    %v1504 = vld [vmem:[#allocation9 + $0x3c] sm:$0xf]
    %v1505 = vld [vmem:[#allocation9 + $0x40] sm:$0xf]
    %v1506 = vld [vmem:[#allocation9 + $0x44] sm:$0xf]
    %v1507 = vld [vmem:[#allocation9 + $0x48] sm:$0xf]
    %v1508 = vld [vmem:[#allocation9 + $0x4c] sm:$0xf]
    %v1509 = vld [vmem:[#allocation9 + $0x50] sm:$0xf]
    %v1510 = vld [vmem:[#allocation9 + $0x54] sm:$0xf]
    %v1511 = vld [vmem:[#allocation9 + $0x58] sm:$0xf]
    %v1512 = vld [vmem:[#allocation9 + $0x5c] sm:$0xf]
    %v1513 = vld [vmem:[#allocation9 + $0x60] sm:$0xf]
    %v1514 = vld [vmem:[#allocation9 + $0x64] sm:$0xf]
    %v1515 = vld [vmem:[#allocation9 + $0x68] sm:$0xf]
    %v1516 = vld [vmem:[#allocation9 + $0x6c] sm:$0xf]
    %v1517 = vld [vmem:[#allocation9 + $0x70] sm:$0xf]
    %v1518 = vld [vmem:[#allocation9 + $0x74] sm:$0xf]
    %v1519 = vld [vmem:[#allocation9 + $0x78] sm:$0xf]
    %v1520 = vld [vmem:[#allocation9 + $0x7c] sm:$0xf]
    %v1521 = vld [vmem:[#allocation9 + $0x80] sm:$0xf]
    %v1522 = vld [vmem:[#allocation9 + $0x84] sm:$0xf]
    %v1523 = vld [vmem:[#allocation9 + $0x88] sm:$0xf]
    %v1524 = vld [vmem:[#allocation9 + $0x8c] sm:$0xf]
    %v1525 = vld [vmem:[#allocation9 + $0x90] sm:$0xf]
    %v1526 = vld [vmem:[#allocation9 + $0x94] sm:$0xf]
    %v1527 = vld [vmem:[#allocation9 + $0x98] sm:$0xf]
    %v1528 = vld [vmem:[#allocation9 + $0x9c] sm:$0xf]
    %v1529 = vld [vmem:[#allocation9 + $0xa0] sm:$0xf]
    %v1530 = vld [vmem:[#allocation9 + $0xa4] sm:$0xf]
    %v1531 = vld [vmem:[#allocation9 + $0xa8] sm:$0xf]
    %v1532 = vld [vmem:[#allocation9 + $0xac] sm:$0xf]
    %v1533 = vld [vmem:[#allocation9 + $0xb0] sm:$0xf]
    %v1534 = vld [vmem:[#allocation9 + $0xb4] sm:$0xf]
    %v1535 = vld [vmem:[#allocation9 + $0xb8] sm:$0xf]
    %v1536 = vld [vmem:[#allocation9 + $0xbc] sm:$0xf]
    %v1537 = vld [vmem:[#allocation9 + $0xc0] sm:$0xf]
    %v1538 = vld [vmem:[#allocation9 + $0xc4] sm:$0xf]
    %v1539 = vld [vmem:[#allocation9 + $0xc8] sm:$0xf]
    %v1540 = vld [vmem:[#allocation9 + $0xcc] sm:$0xf]
    %v1541 = vld [vmem:[#allocation9 + $0xd0] sm:$0xf]
    %v1542 = vld [vmem:[#allocation9 + $0xd4] sm:$0xf]
    %v1543 = vld [vmem:[#allocation9 + $0xd8] sm:$0xf]
    %v1544 = vld [vmem:[#allocation9 + $0xdc] sm:$0xf]
    %v1545 = vld [vmem:[#allocation9 + $0xe0] sm:$0xf]
    %v1546 = vld [vmem:[#allocation9 + $0xe4] sm:$0xf]
    %v1547 = vld [vmem:[#allocation9 + $0xe8] sm:$0xf]
    %v1548 = vld [vmem:[#allocation9 + $0xec] sm:$0xf]
    %v1549 = vld [vmem:[#allocation9 + $0xf0] sm:$0xf]
    %v1550 = vld [vmem:[#allocation9 + $0xf4] sm:$0xf]
    %v1551 = vld [vmem:[#allocation9 + $0xf8] sm:$0xf]
    %v1552 = vld [vmem:[#allocation9 + $0xfc] sm:$0xf]
    %v1553 = vld [vmem:[%s10] sm:$0x1]
    %v1555 = vperm.slane %v1553, 0
    %v1621 = vunpack.c.l.b16 %v1489
    %v1622 = vunpack.c.l.b16 %v1490
    %v1623 = vunpack.c.l.b16 %v1491
    %v1624 = vunpack.c.l.b16 %v1492
    %v1625 = vunpack.c.l.b16 %v1493
    %v1626 = vunpack.c.l.b16 %v1494
    %v1627 = vunpack.c.l.b16 %v1495
    %v1628 = vunpack.c.l.b16 %v1496
    %v1629 = vunpack.c.l.b16 %v1497
    %v1630 = vunpack.c.l.b16 %v1498
    %v1631 = vunpack.c.l.b16 %v1499
    %v1632 = vunpack.c.l.b16 %v1500
    %v1633 = vunpack.c.l.b16 %v1501
    %v1634 = vunpack.c.l.b16 %v1502
    %v1635 = vunpack.c.l.b16 %v1503
    %v1636 = vunpack.c.l.b16 %v1504
    %v1637 = vunpack.c.l.b16 %v1505
    %v1638 = vunpack.c.l.b16 %v1506
    %v1639 = vunpack.c.l.b16 %v1507
    %v1640 = vunpack.c.l.b16 %v1508
    %v1641 = vunpack.c.l.b16 %v1509
    %v1642 = vunpack.c.l.b16 %v1510
    %v1643 = vunpack.c.l.b16 %v1511
    %v1644 = vunpack.c.l.b16 %v1512
    %v1645 = vunpack.c.l.b16 %v1513
    %v1646 = vunpack.c.l.b16 %v1514
    %v1647 = vunpack.c.l.b16 %v1515
    %v1648 = vunpack.c.l.b16 %v1516
    %v1649 = vunpack.c.l.b16 %v1517
    %v1650 = vunpack.c.l.b16 %v1518
    %v1651 = vunpack.c.l.b16 %v1519
    %v1652 = vunpack.c.l.b16 %v1520
    %v1653 = vunpack.c.l.b16 %v1521
    %v1654 = vunpack.c.l.b16 %v1522
    %v1655 = vunpack.c.l.b16 %v1523
    %v1656 = vunpack.c.l.b16 %v1524
    %v1657 = vunpack.c.l.b16 %v1525
    %v1658 = vunpack.c.l.b16 %v1526
    %v1659 = vunpack.c.l.b16 %v1527
    %v1660 = vunpack.c.l.b16 %v1528
    %v1661 = vunpack.c.l.b16 %v1529
    %v1662 = vunpack.c.l.b16 %v1530
    %v1663 = vunpack.c.l.b16 %v1531
    %v1664 = vunpack.c.l.b16 %v1532
    %v1665 = vunpack.c.l.b16 %v1533
    %v1666 = vunpack.c.l.b16 %v1534
    %v1667 = vunpack.c.l.b16 %v1535
    %v1668 = vunpack.c.l.b16 %v1536
    %v1669 = vunpack.c.l.b16 %v1537
    %v1670 = vunpack.c.l.b16 %v1538
    %v1671 = vunpack.c.l.b16 %v1539
    %v1672 = vunpack.c.l.b16 %v1540
    %v1673 = vunpack.c.l.b16 %v1541
    %v1674 = vunpack.c.l.b16 %v1542
    %v1675 = vunpack.c.l.b16 %v1543
    %v1676 = vunpack.c.l.b16 %v1544
    %v1677 = vunpack.c.l.b16 %v1545
    %v1678 = vunpack.c.l.b16 %v1546
    %v1679 = vunpack.c.l.b16 %v1547
    %v1680 = vunpack.c.l.b16 %v1548
    %v1681 = vunpack.c.l.b16 %v1549
    %v1682 = vunpack.c.l.b16 %v1550
    %v1683 = vunpack.c.l.b16 %v1551
    %v1684 = vunpack.c.l.b16 %v1552
    %v1685 = vpack.c.b16 %v1622, %v1621
    %v1686 = vpack.c.b16 %v1624, %v1623
    %v1687 = vpack.c.b16 %v1626, %v1625
    %v1688 = vpack.c.b16 %v1628, %v1627
    %v1689 = vpack.c.b16 %v1630, %v1629
    %v1690 = vpack.c.b16 %v1632, %v1631
    %v1691 = vpack.c.b16 %v1634, %v1633
    %v1692 = vpack.c.b16 %v1636, %v1635
    %v1693 = vpack.c.b16 %v1638, %v1637
    %v1694 = vpack.c.b16 %v1640, %v1639
    %v1695 = vpack.c.b16 %v1642, %v1641
    %v1696 = vpack.c.b16 %v1644, %v1643
    %v1697 = vpack.c.b16 %v1646, %v1645
    %v1698 = vpack.c.b16 %v1648, %v1647
    %v1699 = vpack.c.b16 %v1650, %v1649
    %v1700 = vpack.c.b16 %v1652, %v1651
    %v1701 = vpack.c.b16 %v1654, %v1653
    %v1702 = vpack.c.b16 %v1656, %v1655
    %v1703 = vpack.c.b16 %v1658, %v1657
    %v1704 = vpack.c.b16 %v1660, %v1659
    %v1705 = vpack.c.b16 %v1662, %v1661
    %v1706 = vpack.c.b16 %v1664, %v1663
    %v1707 = vpack.c.b16 %v1666, %v1665
    %v1708 = vpack.c.b16 %v1668, %v1667
    %v1709 = vpack.c.b16 %v1670, %v1669
    %v1710 = vpack.c.b16 %v1672, %v1671
    %v1711 = vpack.c.b16 %v1674, %v1673
    %v1712 = vpack.c.b16 %v1676, %v1675
    %v1713 = vpack.c.b16 %v1678, %v1677
    %v1714 = vpack.c.b16 %v1680, %v1679
    %v1715 = vpack.c.b16 %v1682, %v1681
    %v1716 = vpack.c.b16 %v1684, %v1683
    %1749 = vmatpush.bf16.msra.mxu0 %v1692
    %1750 = vmatpush.bf16.msra.mxu0 %v1691
    %1751 = vmatpush.bf16.msra.mxu0 %v1690
    %1752 = vmatpush.bf16.msra.mxu0 %v1689
    %1753 = vmatpush.bf16.msra.mxu0 %v1688
    %1754 = vmatpush.bf16.msra.mxu0 %v1687
    %1755 = vmatpush.bf16.msra.mxu0 %v1686
    %1756 = vmatpush.bf16.msra.mxu0 %v1685
    %1757 = vmatmul.bf16.gmra.mxu0 %v1485
    %v1758 = vpop.f32.mrf.mxu0
    %v1759 = vadd.f32 %v1555, %v1758
    %v1760 = vpop.f32.mrf.mxu0
    %1761 = vdwg.mxu0
    %1762 = vmatpush.bf16.msra.mxu0 %v1700
    %1763 = vmatpush.bf16.msra.mxu0 %v1699
    %1764 = vmatpush.bf16.msra.mxu0 %v1698
    %1765 = vmatpush.bf16.msra.mxu0 %v1697
    %1766 = vmatpush.bf16.msra.mxu0 %v1696
    %1767 = vmatpush.bf16.msra.mxu0 %v1695
    %1768 = vmatpush.bf16.msra.mxu0 %v1694
    %1769 = vmatpush.bf16.msra.mxu0 %v1693
    %1770 = vmatmul.bf16.gmra.mxu0 %v1486
    %v1771 = vpop.f32.mrf.mxu0
    %v1772 = vadd.f32 %v1759, %v1771
    %v1773 = vpop.f32.mrf.mxu0
    %1774 = vdwg.mxu0
    %1775 = vmatpush.bf16.msra.mxu0 %v1708
    %1776 = vmatpush.bf16.msra.mxu0 %v1707
    %1777 = vmatpush.bf16.msra.mxu0 %v1706
    %1778 = vmatpush.bf16.msra.mxu0 %v1705
    %1779 = vmatpush.bf16.msra.mxu0 %v1704
    %1780 = vmatpush.bf16.msra.mxu0 %v1703
    %1781 = vmatpush.bf16.msra.mxu0 %v1702
    %1782 = vmatpush.bf16.msra.mxu0 %v1701
    %1783 = vmatmul.bf16.gmra.mxu0 %v1487
    %v1784 = vpop.f32.mrf.mxu0
    %v1785 = vadd.f32 %v1772, %v1784
    %v1786 = vpop.f32.mrf.mxu0
    %1787 = vdwg.mxu0
    %1788 = vmatpush.bf16.msra.mxu0 %v1716
    %1789 = vmatpush.bf16.msra.mxu0 %v1715
    %1790 = vmatpush.bf16.msra.mxu0 %v1714
    %1791 = vmatpush.bf16.msra.mxu0 %v1713
    %1792 = vmatpush.bf16.msra.mxu0 %v1712
    %1793 = vmatpush.bf16.msra.mxu0 %v1711
    %1794 = vmatpush.bf16.msra.mxu0 %v1710
    %1795 = vmatpush.bf16.msra.mxu0 %v1709
    %1796 = vmatmul.bf16.gmra.mxu0 %v1488
    %v1797 = vpop.f32.mrf.mxu0
    %v1798 = vadd.f32 %v1785, %v1797
    %v1799 = vpop.f32.mrf.mxu0
    %1800 = vdwg.mxu0
    %v1801 = vmax.f32 %v1798, 0.0
    %v1802 = vpack.c.bf16 %v1801, %v1801
    %v1803 = vld [vmem:[%s11] sm:$0xff]
    %v1804 = vld [vmem:[%s11 + $0x8] sm:$0xff]
    %v1805 = vld [vmem:[%s11 + $0x10] sm:$0xff]
    %v1806 = vld [vmem:[%s11 + $0x18] sm:$0xff]
    %v1807 = vld [vmem:[%s11 + $0x20] sm:$0xff]
    %v1808 = vld [vmem:[%s11 + $0x28] sm:$0xff]
    %v1809 = vld [vmem:[%s11 + $0x30] sm:$0xff]
    %v1810 = vld [vmem:[%s11 + $0x38] sm:$0xff]
    %v1811 = vld [vmem:[%s11 + $0x40] sm:$0xff]
    %v1812 = vld [vmem:[%s11 + $0x48] sm:$0xff]
    %v1813 = vld [vmem:[%s11 + $0x50] sm:$0xff]
    %v1814 = vld [vmem:[%s11 + $0x58] sm:$0xff]
    %v1815 = vld [vmem:[%s11 + $0x60] sm:$0xff]
    %v1816 = vld [vmem:[%s11 + $0x68] sm:$0xff]
    %v1817 = vld [vmem:[%s11 + $0x70] sm:$0xff]
    %v1818 = vld [vmem:[%s11 + $0x78] sm:$0xff]
    %v1819 = vld [vmem:[%s12] sm:$0x3]
    %v1821 = vperm.slane %v1819, 0
    %v1822 = vperm.slane %v1819, 1
    %v1841 = vunpack.c.l.b16 %v1803
    %v1842 = vunpack.c.h.b16 %v1803
    %v1843 = vunpack.c.l.b16 %v1804
    %v1844 = vunpack.c.h.b16 %v1804
    %v1845 = vunpack.c.l.b16 %v1805
    %v1846 = vunpack.c.h.b16 %v1805
    %v1847 = vunpack.c.l.b16 %v1806
    %v1848 = vunpack.c.h.b16 %v1806
    %v1849 = vunpack.c.l.b16 %v1807
    %v1850 = vunpack.c.h.b16 %v1807
    %v1851 = vunpack.c.l.b16 %v1808
    %v1852 = vunpack.c.h.b16 %v1808
    %v1853 = vunpack.c.l.b16 %v1809
    %v1854 = vunpack.c.h.b16 %v1809
    %v1855 = vunpack.c.l.b16 %v1810
    %v1856 = vunpack.c.h.b16 %v1810
    %v1857 = vunpack.c.l.b16 %v1811
    %v1858 = vunpack.c.h.b16 %v1811
    %v1859 = vunpack.c.l.b16 %v1812
    %v1860 = vunpack.c.h.b16 %v1812
    %v1861 = vunpack.c.l.b16 %v1813
    %v1862 = vunpack.c.h.b16 %v1813
    %v1863 = vunpack.c.l.b16 %v1814
    %v1864 = vunpack.c.h.b16 %v1814
    %v1865 = vunpack.c.l.b16 %v1815
    %v1866 = vunpack.c.h.b16 %v1815
    %v1867 = vunpack.c.l.b16 %v1816
    %v1868 = vunpack.c.h.b16 %v1816
    %v1869 = vunpack.c.l.b16 %v1817
    %v1870 = vunpack.c.h.b16 %v1817
    %v1871 = vunpack.c.l.b16 %v1818
    %v1872 = vunpack.c.h.b16 %v1818
    %v1873 = vpack.c.b16 %v1843, %v1841
    %v1874 = vpack.c.b16 %v1844, %v1842
    %v1875 = vpack.c.b16 %v1847, %v1845
    %v1876 = vpack.c.b16 %v1848, %v1846
    %v1877 = vpack.c.b16 %v1851, %v1849
    %v1878 = vpack.c.b16 %v1852, %v1850
    %v1879 = vpack.c.b16 %v1855, %v1853
    %v1880 = vpack.c.b16 %v1856, %v1854
    %v1881 = vpack.c.b16 %v1859, %v1857
    %v1882 = vpack.c.b16 %v1860, %v1858
    %v1883 = vpack.c.b16 %v1863, %v1861
    %v1884 = vpack.c.b16 %v1864, %v1862
    %v1885 = vpack.c.b16 %v1867, %v1865
    %v1886 = vpack.c.b16 %v1868, %v1866
    %v1887 = vpack.c.b16 %v1871, %v1869
    %v1888 = vpack.c.b16 %v1872, %v1870
    %1905 = vmatpush.bf16.msra.mxu0 %v1887
    %1906 = vmatpush.bf16.msra.mxu0 %v1885
    %1907 = vmatpush.bf16.msra.mxu0 %v1883
    %1908 = vmatpush.bf16.msra.mxu0 %v1881
    %1909 = vmatpush.bf16.msra.mxu0 %v1879
    %1910 = vmatpush.bf16.msra.mxu0 %v1877
    %1911 = vmatpush.bf16.msra.mxu0 %v1875
    %1912 = vmatpush.bf16.msra.mxu0 %v1873
    %1913 = vmatmul.bf16.gmra.mxu0 %v1802
    %v1914 = vpop.f32.mrf.mxu0
    %v1915 = vadd.f32 %v1821, %v1914
    %v1916 = vpop.f32.mrf.mxu0
    %1917 = vdwg.mxu0
    %1918 = vmatpush.bf16.msra.mxu0 %v1888
    %1919 = vmatpush.bf16.msra.mxu0 %v1886
    %1920 = vmatpush.bf16.msra.mxu0 %v1884
    %1921 = vmatpush.bf16.msra.mxu0 %v1882
    %1922 = vmatpush.bf16.msra.mxu0 %v1880
    %1923 = vmatpush.bf16.msra.mxu0 %v1878
    %1924 = vmatpush.bf16.msra.mxu0 %v1876
    %1925 = vmatpush.bf16.msra.mxu0 %v1874
    %1926 = vmatmul.bf16.gmra.mxu0 %v1802
    %v1927 = vpop.f32.mrf.mxu0
    %v1928 = vadd.f32 %v1822, %v1927
    %v1929 = vpop.f32.mrf.mxu0
    %1930 = vdwg.mxu0
    %v1931 = vmax.f32 %v1915, 0.0
    %v1932 = vmax.f32 %v1928, 0.0
    %v1933 = vld [vmem:[%s13] sm:$0x1]
    %v1935 = vperm.slane %v1933, 0
    %v1937 = vmul.f32 %v1931, %v1935
    %1938 = vadd.xlane.f32.xlu0 %v1937
    %v1939 = vpop.xlane.xlu0 %1938
    %v1940 = vld [vmem:[#allocation2] sm:$0x1]
    %v1942 = vperm.slane %v1940, 0
    %v1944 = vadd.f32 %v1939, %v1942
    %v1945 = vpack.c.bf16 %v1932, %v1932
    %v1946 = vld [vmem:[#allocation11] sm:$0xf]
    %v1947 = vld [vmem:[#allocation11 + $0x4] sm:$0xf]
    %v1948 = vld [vmem:[#allocation11 + $0x8] sm:$0xf]
    %v1949 = vld [vmem:[#allocation11 + $0xc] sm:$0xf]
    %v1950 = vld [vmem:[#allocation11 + $0x10] sm:$0xf]
    %v1951 = vld [vmem:[#allocation11 + $0x14] sm:$0xf]
    %v1952 = vld [vmem:[#allocation11 + $0x18] sm:$0xf]
    %v1953 = vld [vmem:[#allocation11 + $0x1c] sm:$0xf]
    %v1954 = vld [vmem:[#allocation11 + $0x20] sm:$0xf]
    %v1955 = vld [vmem:[#allocation11 + $0x24] sm:$0xf]
    %v1956 = vld [vmem:[#allocation11 + $0x28] sm:$0xf]
    %v1957 = vld [vmem:[#allocation11 + $0x2c] sm:$0xf]
    %v1958 = vld [vmem:[#allocation11 + $0x30] sm:$0xf]
    %v1959 = vld [vmem:[#allocation11 + $0x34] sm:$0xf]
    %v1960 = vld [vmem:[#allocation11 + $0x38] sm:$0xf]
    %v1961 = vld [vmem:[#allocation11 + $0x3c] sm:$0xf]
    %v1962 = vld [vmem:[%s16] sm:$0x1]
    %v1964 = vperm.slane %v1962, 0
    %v1982 = vunpack.c.l.b16 %v1946
    %v1983 = vunpack.c.l.b16 %v1947
    %v1984 = vunpack.c.l.b16 %v1948
    %v1985 = vunpack.c.l.b16 %v1949
    %v1986 = vunpack.c.l.b16 %v1950
    %v1987 = vunpack.c.l.b16 %v1951
    %v1988 = vunpack.c.l.b16 %v1952
    %v1989 = vunpack.c.l.b16 %v1953
    %v1990 = vunpack.c.l.b16 %v1954
    %v1991 = vunpack.c.l.b16 %v1955
    %v1992 = vunpack.c.l.b16 %v1956
    %v1993 = vunpack.c.l.b16 %v1957
    %v1994 = vunpack.c.l.b16 %v1958
    %v1995 = vunpack.c.l.b16 %v1959
    %v1996 = vunpack.c.l.b16 %v1960
    %v1997 = vunpack.c.l.b16 %v1961
    %v1998 = vpack.c.b16 %v1983, %v1982
    %v1999 = vpack.c.b16 %v1985, %v1984
    %v2000 = vpack.c.b16 %v1987, %v1986
    %v2001 = vpack.c.b16 %v1989, %v1988
    %v2002 = vpack.c.b16 %v1991, %v1990
    %v2003 = vpack.c.b16 %v1993, %v1992
    %v2004 = vpack.c.b16 %v1995, %v1994
    %v2005 = vpack.c.b16 %v1997, %v1996
    %2014 = vmatpush.bf16.msra.mxu0 %v2005
    %2015 = vmatpush.bf16.msra.mxu0 %v2004
    %2016 = vmatpush.bf16.msra.mxu0 %v2003
    %2017 = vmatpush.bf16.msra.mxu0 %v2002
    %2018 = vmatpush.bf16.msra.mxu0 %v2001
    %2019 = vmatpush.bf16.msra.mxu0 %v2000
    %2020 = vmatpush.bf16.msra.mxu0 %v1999
    %2021 = vmatpush.bf16.msra.mxu0 %v1998
    %2022 = vmatmul.bf16.gmra.mxu0 %v1945
    %v2023 = vpop.f32.mrf.mxu0
    %v2024 = vadd.f32 %v1964, %v2023
    %v2025 = vpop.f32.mrf.mxu0
    %2026 = vdwg.mxu0
    %2028 = vset.pattern.permute.xlu0 0
    %2029 = vperm.xlu0 %2028, %v1944
    %v2030 = vpop.permute.xlu0 %2029
    %v2032 = vadd.f32 %v2030, %v2024
    %2033 = vadd.xlane.f32.xlu0 %v2024
    %v2034 = vpop.xlane.xlu0 %2033
    %v2035 = vmul.f32 %v2034, 0.5
    %v2036 = vsub.f32 %v2032, %v2035
    %2037 = vst [vmem:[#allocation12] sm:$0x3] %v2036
    // Predicated region
    $region90: #{forward.1} parent=1 // pred_check
      _
    $region91: #{forward.1} parent=1 // pred_check_branch
      %2039 = sbr.rel (0) target = $region93
    $region92: #{forward.1} parent=1 // pred_region
      %2041 = vsyncadd [#allocation5], 0
      %s2043 = sshll.u32 [#allocation12], 4
      %s2044 = int_to_ptr.vmem [resolvable:$true] %s2043
      %s2045 = sshll.u32 %s17, 4
      %s2046 = int_to_ptr.hbm [resolvable:$true] %s2045
      %2048 = dma.vmem_to_hbm [thread:$0]  %s2044, 32, %s2046, [#allocation5]
    $region93: #{forward.1} parent=1 // pred_fallthru
      _
    // Predicated region
    $region94: #{forward.1} parent=1 // pred_check
      _
    $region95: #{forward.1} parent=1 // pred_check_branch
      %2050 = sbr.rel (0) target = $region97
    $region96: #{forward.1} parent=1 // pred_region
      %2052 = dma.done [#allocation5], 32
    $region97: #{forward.1} parent=1 // pred_fallthru
      _
    %2053 = vsyncpa [#allocation4], 1
    %2054 = vsyncpa [#allocation7], 1
    %2055 = vsyncpa [#allocation10], 1
    %2056 = vsyncpa [#allocation5], 1

</llo_original>
